<compile_context>
chip_gen: v6e
topology: v6e:2x2x1
jax: 0.10.0
libtpu: 0.0.40
codegen_flags: <defaults>
</compile_context>

<pallas_src>
import functools

import jax
import jax.numpy as jnp
from jax.experimental import pallas as pl
from jax.experimental.pallas import tpu as pltpu


def _layer_norm(v, gamma, beta, eps=1e-5):
    mean = jnp.mean(v, axis=-1, keepdims=True)
    var = jnp.mean((v - mean) ** 2, axis=-1, keepdims=True)
    return (v - mean) * jax.lax.rsqrt(var + eps) * gamma + beta


# --------------------------------- kernel ------------------------------------
def encoder_layers_kernel(rowid_ref, colid_ref, x_hbm_ref,
                          wqkv_ref, wfc_ref, w1_ref, w2_ref, vec_ref,
                          o_ref, bias_ref, cat_ref, load_sem, *, heads):
    """One grid step == one TransformerBlock applied to the resident activations."""
    layer = pl.program_id(0)
    NS, E = o_ref.shape
    hd = E // heads
    H = w1_ref.shape[1]

    # Layer 0: DMA embeddings HBM -> resident output block, and build the additive
    # attention bias (key padding + batch block-diagonal) once into VMEM scratch.
    @pl.when(layer == 0)
    def _():
        cp = pltpu.make_async_copy(x_hbm_ref, o_ref, load_sem.at[0])
        cp.start()
        cp.wait()
        # allowed[i, j]  <=>  same batch AND key j not padded
        # (colid is batch-id for kept keys, -1 for padded keys -> never equal).
        allowed = rowid_ref[...] == colid_ref[...]            # (NS,1)==(1,NS) -> (NS,NS)
        bias_ref[...] = jnp.where(allowed, 0.0, -1e20).astype(jnp.float32)

    x = o_ref[...]                                   # (NS, E) f32, resident in VMEM

    # Packed per-layer vectors: rows = [bfc, g1, b1n, bf2, g2, b2n, bf1, unused]
    vec = vec_ref[...]                               # (8, Hp) f32
    bfc = vec[0:1, :E]
    g1, b1n = vec[1:2, :E], vec[2:3, :E]
    bf2 = vec[3:4, :E]
    g2, b2n = vec[4:5, :E], vec[5:6, :E]
    bf1 = vec[6:7, :H]

    # --- SelfAttention --------------------------------------------------------
    # Q|K|V for all heads & all batch rows in one bf16 matmul (block-diag weights).
    # 1/sqrt(E) scale is already folded into the Q weights on the host.
    xb = x.astype(jnp.bfloat16)
    qkv = jnp.dot(xb, wqkv_ref[...], preferred_element_type=jnp.float32)   # (NS, 3E)
    qkvb = qkv.astype(jnp.bfloat16)
    bias = bias_ref[...]                             # (NS, NS) additive mask (0 / -1e20)

    # heads is small & static; each iteration only writes its slice of cat_ref, so
    # per-head (NS,NS) temporaries die immediately (no carried accumulator chain).
    for h in range(heads):
        sl = slice(h * hd, (h + 1) * hd)
        qh = qkvb[:, h * hd:(h + 1) * hd]
        kh = qkvb[:, E + h * hd:E + (h + 1) * hd]
        vh = qkvb[:, 2 * E + h * hd:2 * E + (h + 1) * hd]
        energy = jax.lax.dot_general(                # q @ k^T without an explicit transpose
            qh, kh, (((1,), (1,)), ((), ())), preferred_element_type=jnp.float32)
        logits = energy + bias
        logits = logits - jnp.max(logits, axis=-1, keepdims=True)
        p = jnp.exp(logits)
        attn = p * pl.reciprocal(jnp.sum(p, axis=-1, keepdims=True), approx=True)
        out_h = jnp.dot(attn.astype(jnp.bfloat16), vh,
                        preferred_element_type=jnp.float32)                # (NS, hd)
        cat_ref[:, sl] = out_h.astype(jnp.bfloat16)  # concat-by-store into VMEM scratch

    # Single K=E fc_out matmul over the concatenated heads (good MXU fill).
    attn_lin = jnp.dot(cat_ref[...], wfc_ref[...],
                       preferred_element_type=jnp.float32) + bfc

    # --- TransformerBlock epilogue -------------------------------------------
    # TODO(synk): nn.Dropout is identity at inference; not applied here.
    x1 = _layer_norm(attn_lin + x, g1, b1n)
    h1 = jnp.maximum(
        jnp.dot(x1.astype(jnp.bfloat16), w1_ref[...],
                preferred_element_type=jnp.float32) + bf1, 0.0)
    ff = jnp.dot(h1.astype(jnp.bfloat16), w2_ref[...],
                 preferred_element_type=jnp.float32) + bf2
    o_ref[...] = _layer_norm(ff + x1, g2, b2n)       # feeds the next layer (resident)


# --------------------------------- wrapper -----------------------------------
def encoder_forward(token_ids, mask, params, heads):
    """Pallas version of Encoder.forward (dropout = identity)."""
    N, S = token_ids.shape
    E = params["word_emb"].shape[1]
    L = len(params["layers"])
    H = params["layers"][0]["w1"].shape[0]
    NS = N * S
    Hp = max(E, H)
    scale = 1.0 / (E ** 0.5)                         # PyTorch divides by sqrt(embed_size)

    # Embedding gather stays in plain JAX (glue).
    word = jnp.take(params["word_emb"], token_ids, axis=0)               # (N, S, E)
    pos = jnp.take(params["pos_emb"], jnp.arange(S), axis=0)[None]       # (1, S, E)
    x = (word + pos).astype(jnp.float32).reshape(NS, E)

    # Tiny mask inputs (the dense (NS,NS) bias is rebuilt in-kernel at layer 0):
    #   row_id[i]  = batch index of query row i
    #   col_id[j]  = batch index of key j if kept, else -1 (never matches a batch id)
    batch_id = jnp.repeat(jnp.arange(N, dtype=jnp.float32), S)           # (NS,)
    keep_flat = (mask != 0).reshape(NS)
    row_id = batch_id.reshape(NS, 1)                                     # (NS, 1) f32
    col_id = jnp.where(keep_flat, batch_id, -1.0).reshape(1, NS)         # (1, NS) f32

    # Pack / pre-transpose weights, stacked over layers, cast matmul weights to bf16.
    eye_h = jnp.eye(heads, dtype=jnp.float32)

    def block_diag_t(w):            # (hd, hd) -> (E, E) block-diagonal of w.T
        return jnp.kron(eye_h, w.T)

    wqkv_l, wfc_l, w1_l, w2_l, vec_l = [], [], [], [], []
    for lp in params["layers"]:
        wqkv_l.append(jnp.concatenate(
            [block_diag_t(lp["wq"] * scale),          # fold 1/sqrt(E) into Q weights
             block_diag_t(lp["wk"]),
             block_diag_t(lp["wv"])], axis=1))                           # (E, 3E)
        wfc_l.append(lp["wfc"].T)                                        # (E, E)
        w1_l.append(lp["w1"].T)                                          # (E, H)
        w2_l.append(lp["w2"].T)                                          # (H, E)
        vv = jnp.zeros((8, Hp), jnp.float32)
        vv = (vv.at[0, :E].set(lp["bfc"][0]).at[1, :E].set(lp["g1"][0])
                .at[2, :E].set(lp["b1n"][0]).at[3, :E].set(lp["bf2"][0])
                .at[4, :E].set(lp["g2"][0]).at[5, :E].set(lp["b2n"][0])
                .at[6, :H].set(lp["bf1"][0]))
        vec_l.append(vv)

    wqkv = jnp.stack(wqkv_l).astype(jnp.bfloat16)    # (L, E, 3E)
    wfc = jnp.stack(wfc_l).astype(jnp.bfloat16)      # (L, E, E)
    w1 = jnp.stack(w1_l).astype(jnp.bfloat16)        # (L, E, H)
    w2 = jnp.stack(w2_l).astype(jnp.bfloat16)        # (L, H, E)
    vec = jnp.stack(vec_l)                           # (L, 8, Hp) f32

    # Explicit VMEM budget: resident output + bias/concat scratch + double-buffered
    # per-layer weights + softmax temporaries, with headroom; capped at v7x's 64 MiB.
    bf16_b, f32_b = 2, 4
    w_bytes = (3 * E * E + E * E + E * H + H * E) * bf16_b + 8 * Hp * f32_b
    est = (2 * NS * E * f32_b          # resident output block (+ writeback buffer)
           + NS * NS * f32_b           # bias scratch (single copy)
           + NS * E * bf16_b           # head-concat scratch
           + 4 * NS * f32_b            # row/col id inputs (double-buffered)
           + 2 * w_bytes               # double-buffered per-layer weights
           + 6 * NS * NS * f32_b)      # softmax / energy temporaries headroom
    vmem_limit = int(min(max(2 * est, 16 << 20), 64 << 20))

    kernel = functools.partial(encoder_layers_kernel, heads=heads)
    out = pl.pallas_call(
        kernel,
        out_shape=jax.ShapeDtypeStruct((NS, E), jnp.float32),
        grid_spec=pltpu.PrefetchScalarGridSpec(
            num_scalar_prefetch=0,
            grid=(L,),
            in_specs=[
                pl.BlockSpec((NS, 1), lambda l: (0, 0)),                 # row batch ids
                pl.BlockSpec((1, NS), lambda l: (0, 0)),                 # col ids / padding
                pl.BlockSpec(memory_space=pl.ANY),                       # embeddings (HBM)
                pl.BlockSpec((pl.Squeezed(), E, 3 * E), lambda l: (l, 0, 0)),
                pl.BlockSpec((pl.Squeezed(), E, E), lambda l: (l, 0, 0)),
                pl.BlockSpec((pl.Squeezed(), E, H), lambda l: (l, 0, 0)),
                pl.BlockSpec((pl.Squeezed(), H, E), lambda l: (l, 0, 0)),
                pl.BlockSpec((pl.Squeezed(), 8, Hp), lambda l: (l, 0, 0)),
            ],
            out_specs=pl.BlockSpec((NS, E), lambda l: (0, 0)),           # resident output
            scratch_shapes=[
                pltpu.VMEM((NS, NS), jnp.float32),       # additive attention bias
                pltpu.VMEM((NS, E), jnp.bfloat16),       # concatenated head outputs
                pltpu.SemaphoreType.DMA((1,)),           # layer-0 embedding DMA
            ]),
        compiler_params=pltpu.CompilerParams(
            dimension_semantics=("arbitrary",),          # layers are sequentially dependent
            vmem_limit_bytes=vmem_limit),
    )(row_id, col_id, x, wqkv, wfc, w1, w2, vec)
    return out.reshape(N, S, E)


# ----------------------------- parameter init ---------------------------------
def init_params(key, vocab, E, num_layers, heads, ffe, max_len):
    hd = E // heads
    hidden = ffe * E
    keys = jax.random.split(key, 2 + num_layers)

    def lin(k, out_dim, in_dim, scale=0.1):
        return jax.random.normal(k, (out_dim, in_dim), jnp.float32) * scale

    params = {
        "word_emb": jax.random.normal(keys[0], (vocab, E), jnp.float32) * 0.1,
        "pos_emb": jax.random.normal(keys[1], (max_len, E), jnp.float32) * 0.1,
        "layers": [],
    }
    for li in range(num_layers):
        ks = jax.random.split(keys[2 + li], 12)
        params["layers"].append({
            "wv": lin(ks[0], hd, hd),
            "wk": lin(ks[1], hd, hd),
            "wq": lin(ks[2], hd, hd),
            "wfc": lin(ks[3], E, E),
            "bfc": jax.random.normal(ks[4], (1, E), jnp.float32) * 0.05,
            "g1": 1.0 + jax.random.normal(ks[5], (1, E), jnp.float32) * 0.05,
            "b1n": jax.random.normal(ks[6], (1, E), jnp.float32) * 0.05,
            "w1": lin(ks[7], hidden, E),
            "bf1": jax.random.normal(ks[8], (1, hidden), jnp.float32) * 0.05,
            "w2": lin(ks[9], E, hidden),
            "bf2": jax.random.normal(ks[10], (1, E), jnp.float32) * 0.05,
            "g2": 1.0 + jax.random.normal(ks[11], (1, E), jnp.float32) * 0.05,
            "b2n": jnp.zeros((1, E), jnp.float32),
        })
    return params


# ----------------------------- pure-JAX reference -----------------------------
def ref_encoder(token_ids, mask, params, heads, E):
    N, S = token_ids.shape
    hd = E // heads

    def self_attention(v, k, q, mask, lp):
        L = v.shape[1]
        vr = v.reshape(N, L, heads, hd)
        kr = k.reshape(N, L, heads, hd)
        qr = q.reshape(N, L, heads, hd)
        vv = jnp.einsum("nlhd,ed->nlhe", vr, lp["wv"])
        kk = jnp.einsum("nlhd,ed->nlhe", kr, lp["wk"])
        qq = jnp.einsum("nlhd,ed->nlhe", qr, lp["wq"])
        energy = jnp.einsum("nqhd,nkhd->nhqk", qq, kk)
        m = mask.astype(jnp.float32).reshape(N, 1, 1, L)
        energy = jnp.where(m == 0.0, -1e20, energy)
        attn = jax.nn.softmax(energy / jnp.sqrt(jnp.float32(E)), axis=3)
        out = jnp.einsum("nhql,nlhd->nqhd", attn, vv).reshape(N, L, E)
        return out @ lp["wfc"].T + lp["bfc"][0]

    word = jnp.take(params["word_emb"], token_ids, axis=0)
    pos = jnp.take(params["pos_emb"], jnp.arange(S), axis=0)[None]
    out = word + pos
    for lp in params["layers"]:
        a = self_attention(out, out, out, mask, lp)
        x1 = _layer_norm(a + out, lp["g1"][0], lp["b1n"][0])
        h1 = jnp.maximum(x1 @ lp["w1"].T + lp["bf1"][0], 0.0)
        ff = h1 @ lp["w2"].T + lp["bf2"][0]
        out = _layer_norm(ff + x1, lp["g2"][0], lp["b2n"][0])
    return out


if __name__ == "__main__":
    # Small config consistent with the module: vocab=50, embed=32, heads=4,
    # forward_expansion=4, num_layers=2, max_length=16, batch=2, seq=8.
    VOCAB, E, HEADS, FFE, LAYERS, MAXLEN = 50, 32, 4, 4, 2, 16
    N, S = 2, 8

    key = jax.random.PRNGKey(0)
    kp, kx = jax.random.split(key)
    params = init_params(kp, VOCAB, E, LAYERS, HEADS, FFE, MAXLEN)

    token_ids = jax.random.randint(kx, (N, S), 0, VOCAB, dtype=jnp.int32)
    # Padding mask: batch row 1 has its last two key positions masked out.
    mask = jnp.ones((N, S), jnp.float32).at[1, 6:].set(0.0)

    out = encoder_forward(token_ids, mask, params, HEADS)
    out = jax.block_until_ready(out)

    ref = ref_encoder(token_ids, mask, params, HEADS, E)
    assert out.shape == (N, S, E)
    # Tolerance re-validated for bf16 MXU operands with f32 accumulation.
    max_err = float(jnp.max(jnp.abs(out - ref)))
    assert bool(jnp.allclose(out, ref, atol=5e-2, rtol=5e-2)), \
        f"mismatch vs reference (max abs err {max_err})"

    print("KERNEL_OK")
</pallas_src>

<mosaic_0001>
module attributes {stable_mosaic.version = 11 : i64} {
  func.func @encoder_layers_kernel(%arg0: i32, %arg1: memref<16x1xf32, #tpu.memory_space<vmem>>, %arg2: memref<1x16xf32, #tpu.memory_space<vmem>>, %arg3: memref<16x32xf32, #tpu.memory_space<any>>, %arg4: memref<1x32x96xbf16, #tpu.memory_space<vmem>>, %arg5: memref<1x32x32xbf16, #tpu.memory_space<vmem>>, %arg6: memref<1x32x128xbf16, #tpu.memory_space<vmem>>, %arg7: memref<1x128x32xbf16, #tpu.memory_space<vmem>>, %arg8: memref<1x8x128xf32, #tpu.memory_space<vmem>>, %arg9: memref<16x32xf32, #tpu.memory_space<vmem>>, %arg10: memref<16x16xf32, #tpu.memory_space<vmem>>, %arg11: memref<16x32xbf16, #tpu.memory_space<vmem>>, %arg12: memref<1x!tpu.dma_semaphore, #tpu.memory_space<semaphore_mem>>) attributes {dimension_semantics = [#tpu.dimension_semantics<arbitrary>], iteration_bounds = array<i64: 2>, scalar_prefetch = 0 : i64, scratch_operands = 3 : i64, tpu.core_type = #tpu.core_type<tc>, window_params = [{pipeline_mode = #tpu.pipeline_mode<synchronous>, transform_indices = @transform_0, window_bounds = array<i64: 16, 1>}, {pipeline_mode = #tpu.pipeline_mode<synchronous>, transform_indices = @transform_1, window_bounds = array<i64: 1, 16>}, {}, {transform_indices = @transform_3, window_bounds = array<i64: 1, 32, 96>}, {transform_indices = @transform_4, window_bounds = array<i64: 1, 32, 32>}, {transform_indices = @transform_5, window_bounds = array<i64: 1, 32, 128>}, {transform_indices = @transform_6, window_bounds = array<i64: 1, 128, 32>}, {transform_indices = @transform_7, window_bounds = array<i64: 1, 8, 128>}, {pipeline_mode = #tpu.pipeline_mode<synchronous>, transform_indices = @transform_8, window_bounds = array<i64: 16, 32>}]} {
    %c0_i32 = arith.constant 0 : i32
    %0 = arith.cmpi eq, %arg0, %c0_i32 : i32
    %1 = arith.extui %0 : i1 to i32
    %c0_i32_0 = arith.constant 0 : i32
    %2 = arith.cmpi ne, %1, %c0_i32_0 : i32
    scf.if %2 {
      %c0_i32_58 = arith.constant 0 : i32
      %162 = tpu.memref_slice %arg12[%c0_i32_58] : memref<1x!tpu.dma_semaphore, #tpu.memory_space<semaphore_mem>> -> memref<1x!tpu.dma_semaphore, #tpu.memory_space<semaphore_mem>>
      %163 = tpu.memref_squeeze %162 : memref<1x!tpu.dma_semaphore, #tpu.memory_space<semaphore_mem>> -> memref<!tpu.dma_semaphore, #tpu.memory_space<semaphore_mem>>
      tpu.enqueue_dma source(%arg3 : memref<16x32xf32, #tpu.memory_space<any>>) target(%arg9 : memref<16x32xf32, #tpu.memory_space<vmem>>) target_semaphore(%163 : memref<!tpu.dma_semaphore, #tpu.memory_space<semaphore_mem>>)
      %c0_i32_59 = arith.constant 0 : i32
      %164 = tpu.memref_slice %arg12[%c0_i32_59] : memref<1x!tpu.dma_semaphore, #tpu.memory_space<semaphore_mem>> -> memref<1x!tpu.dma_semaphore, #tpu.memory_space<semaphore_mem>>
      %165 = tpu.memref_squeeze %164 : memref<1x!tpu.dma_semaphore, #tpu.memory_space<semaphore_mem>> -> memref<!tpu.dma_semaphore, #tpu.memory_space<semaphore_mem>>
      tpu.wait_dma2 semaphore(%165 : memref<!tpu.dma_semaphore, #tpu.memory_space<semaphore_mem>>) src(%arg3 : memref<16x32xf32, #tpu.memory_space<any>>) dst(%arg9 : memref<16x32xf32, #tpu.memory_space<vmem>>)
      %c0_60 = arith.constant 0 : index
      %c0_61 = arith.constant 0 : index
      %166 = vector.load %arg1[%c0_60, %c0_61] : memref<16x1xf32, #tpu.memory_space<vmem>>, vector<16x1xf32>
      %c0_62 = arith.constant 0 : index
      %c0_63 = arith.constant 0 : index
      %167 = vector.load %arg2[%c0_62, %c0_63] : memref<1x16xf32, #tpu.memory_space<vmem>>, vector<1x16xf32>
      %168 = vector.broadcast %166 : vector<16x1xf32> to vector<16x16xf32>
      %169 = vector.broadcast %167 : vector<1x16xf32> to vector<16x16xf32>
      %170 = arith.cmpf oeq, %168, %169 : vector<16x16xf32>
      %cst_64 = arith.constant 0.000000e+00 : f32
      %cst_65 = arith.constant -1.000000e+20 : f32
      %171 = vector.broadcast %cst_64 : f32 to vector<16x16xf32>
      %172 = vector.broadcast %cst_65 : f32 to vector<16x16xf32>
      %173 = arith.select %170, %171, %172 : vector<16x16xi1>, vector<16x16xf32>
      %c0_66 = arith.constant 0 : index
      %c0_67 = arith.constant 0 : index
      %174 = vector.load %arg10[%c0_66, %c0_67] : memref<16x16xf32, #tpu.memory_space<vmem>>, vector<16x16xf32>
      tpu.vector_store %arg10[%c0_66, %c0_67], %173 {strides = array<i32>} : memref<16x16xf32, #tpu.memory_space<vmem>>, vector<16x16xf32>,
    } else {
    }
    %c0 = arith.constant 0 : index
    %c0_1 = arith.constant 0 : index
    %3 = vector.load %arg9[%c0, %c0_1] : memref<16x32xf32, #tpu.memory_space<vmem>>, vector<16x32xf32>
    %c0_2 = arith.constant 0 : index
    %c0_3 = arith.constant 0 : index
    %c0_4 = arith.constant 0 : index
    %4 = vector.load %arg8[%c0_2, %c0_3, %c0_4] : memref<1x8x128xf32, #tpu.memory_space<vmem>>, vector<1x8x128xf32>
    %5 = vector.shape_cast %4 : vector<1x8x128xf32> to vector<8x128xf32>
    %6 = vector.extract_strided_slice %5 {offsets = [0, 0], sizes = [1, 32], strides = [1, 1]} : vector<8x128xf32> to vector<1x32xf32>
    %7 = vector.extract_strided_slice %5 {offsets = [1, 0], sizes = [1, 32], strides = [1, 1]} : vector<8x128xf32> to vector<1x32xf32>
    %8 = vector.extract_strided_slice %5 {offsets = [2, 0], sizes = [1, 32], strides = [1, 1]} : vector<8x128xf32> to vector<1x32xf32>
    %9 = vector.extract_strided_slice %5 {offsets = [3, 0], sizes = [1, 32], strides = [1, 1]} : vector<8x128xf32> to vector<1x32xf32>
    %10 = vector.extract_strided_slice %5 {offsets = [4, 0], sizes = [1, 32], strides = [1, 1]} : vector<8x128xf32> to vector<1x32xf32>
    %11 = vector.extract_strided_slice %5 {offsets = [5, 0], sizes = [1, 32], strides = [1, 1]} : vector<8x128xf32> to vector<1x32xf32>
    %12 = vector.extract_strided_slice %5 {offsets = [6, 0], sizes = [1, 128], strides = [1, 1]} : vector<8x128xf32> to vector<1x128xf32>
    %13 = arith.truncf %3 : vector<16x32xf32> to vector<16x32xbf16>
    %c0_5 = arith.constant 0 : index
    %c0_6 = arith.constant 0 : index
    %c0_7 = arith.constant 0 : index
    %14 = vector.load %arg4[%c0_5, %c0_6, %c0_7] : memref<1x32x96xbf16, #tpu.memory_space<vmem>>, vector<1x32x96xbf16>
    %15 = vector.shape_cast %14 : vector<1x32x96xbf16> to vector<32x96xbf16>
    %cst = arith.constant dense<0.000000e+00> : vector<16x96xf32>
    %16 = tpu.matmul %13, %15, %cst {dimension_numbers = #tpu.dot_dimension_numbers<[1], [0], [0], [1], [0, 0, 1, 1], [], []>} : vector<16x32xbf16>, vector<32x96xbf16>, vector<16x96xf32> -> vector<16x96xf32>
    %17 = arith.truncf %16 : vector<16x96xf32> to vector<16x96xbf16>
    %c0_8 = arith.constant 0 : index
    %c0_9 = arith.constant 0 : index
    %18 = vector.load %arg10[%c0_8, %c0_9] : memref<16x16xf32, #tpu.memory_space<vmem>>, vector<16x16xf32>
    %19 = vector.extract_strided_slice %17 {offsets = [0, 0], sizes = [16, 8], strides = [1, 1]} : vector<16x96xbf16> to vector<16x8xbf16>
    %20 = vector.extract_strided_slice %17 {offsets = [0, 32], sizes = [16, 8], strides = [1, 1]} : vector<16x96xbf16> to vector<16x8xbf16>
    %21 = vector.extract_strided_slice %17 {offsets = [0, 64], sizes = [16, 8], strides = [1, 1]} : vector<16x96xbf16> to vector<16x8xbf16>
    %cst_10 = arith.constant dense<0.000000e+00> : vector<16x16xf32>
    %22 = tpu.matmul %19, %20, %cst_10 {dimension_numbers = #tpu.dot_dimension_numbers<[1], [1], [0], [0], [0, 0, 1, 0], [], []>} : vector<16x8xbf16>, vector<16x8xbf16>, vector<16x16xf32> -> vector<16x16xf32>
    %23 = arith.addf %22, %18 : vector<16x16xf32>
    %cst_11 = arith.constant dense<0xFF800000> : vector<16xf32>
    %24 = vector.multi_reduction <maximumf>, %23, %cst_11 [1] : vector<16x16xf32> to vector<16xf32>
    %25 = vector.shape_cast %24 : vector<16xf32> to vector<16x1xf32>
    %26 = vector.broadcast %25 : vector<16x1xf32> to vector<16x16xf32>
    %27 = arith.subf %23, %26 : vector<16x16xf32>
    %28 = math.exp %27 : vector<16x16xf32>
    %cst_12 = arith.constant dense<0.000000e+00> : vector<16xf32>
    %29 = vector.multi_reduction <add>, %28, %cst_12 [1] : vector<16x16xf32> to vector<16xf32>
    %30 = vector.shape_cast %29 : vector<16xf32> to vector<16x1xf32>
    %31 = tpu.reciprocal %30 {approx = true} : vector<16x1xf32> -> vector<16x1xf32>
    %32 = vector.broadcast %31 : vector<16x1xf32> to vector<16x16xf32>
    %33 = arith.mulf %28, %32 : vector<16x16xf32>
    %34 = arith.truncf %33 : vector<16x16xf32> to vector<16x16xbf16>
    %cst_13 = arith.constant dense<0.000000e+00> : vector<16x8xf32>
    %35 = tpu.matmul %34, %21, %cst_13 {dimension_numbers = #tpu.dot_dimension_numbers<[1], [0], [0], [1], [0, 0, 1, 1], [], []>} : vector<16x16xbf16>, vector<16x8xbf16>, vector<16x8xf32> -> vector<16x8xf32>
    %36 = arith.truncf %35 : vector<16x8xf32> to vector<16x8xbf16>
    %c0_14 = arith.constant 0 : index
    %c0_15 = arith.constant 0 : index
    %37 = vector.load %arg11[%c0_14, %c0_15] : memref<16x32xbf16, #tpu.memory_space<vmem>>, vector<16x8xbf16>
    tpu.vector_store %arg11[%c0_14, %c0_15], %36 {strides = array<i32>} : memref<16x32xbf16, #tpu.memory_space<vmem>>, vector<16x8xbf16>,
    %38 = vector.extract_strided_slice %17 {offsets = [0, 8], sizes = [16, 8], strides = [1, 1]} : vector<16x96xbf16> to vector<16x8xbf16>
    %39 = vector.extract_strided_slice %17 {offsets = [0, 40], sizes = [16, 8], strides = [1, 1]} : vector<16x96xbf16> to vector<16x8xbf16>
    %40 = vector.extract_strided_slice %17 {offsets = [0, 72], sizes = [16, 8], strides = [1, 1]} : vector<16x96xbf16> to vector<16x8xbf16>
    %cst_16 = arith.constant dense<0.000000e+00> : vector<16x16xf32>
    %41 = tpu.matmul %38, %39, %cst_16 {dimension_numbers = #tpu.dot_dimension_numbers<[1], [1], [0], [0], [0, 0, 1, 0], [], []>} : vector<16x8xbf16>, vector<16x8xbf16>, vector<16x16xf32> -> vector<16x16xf32>
    %42 = arith.addf %41, %18 : vector<16x16xf32>
    %cst_17 = arith.constant dense<0xFF800000> : vector<16xf32>
    %43 = vector.multi_reduction <maximumf>, %42, %cst_17 [1] : vector<16x16xf32> to vector<16xf32>
    %44 = vector.shape_cast %43 : vector<16xf32> to vector<16x1xf32>
    %45 = vector.broadcast %44 : vector<16x1xf32> to vector<16x16xf32>
    %46 = arith.subf %42, %45 : vector<16x16xf32>
    %47 = math.exp %46 : vector<16x16xf32>
    %cst_18 = arith.constant dense<0.000000e+00> : vector<16xf32>
    %48 = vector.multi_reduction <add>, %47, %cst_18 [1] : vector<16x16xf32> to vector<16xf32>
    %49 = vector.shape_cast %48 : vector<16xf32> to vector<16x1xf32>
    %50 = tpu.reciprocal %49 {approx = true} : vector<16x1xf32> -> vector<16x1xf32>
    %51 = vector.broadcast %50 : vector<16x1xf32> to vector<16x16xf32>
    %52 = arith.mulf %47, %51 : vector<16x16xf32>
    %53 = arith.truncf %52 : vector<16x16xf32> to vector<16x16xbf16>
    %cst_19 = arith.constant dense<0.000000e+00> : vector<16x8xf32>
    %54 = tpu.matmul %53, %40, %cst_19 {dimension_numbers = #tpu.dot_dimension_numbers<[1], [0], [0], [1], [0, 0, 1, 1], [], []>} : vector<16x16xbf16>, vector<16x8xbf16>, vector<16x8xf32> -> vector<16x8xf32>
    %55 = arith.truncf %54 : vector<16x8xf32> to vector<16x8xbf16>
    %c0_20 = arith.constant 0 : index
    %c8 = arith.constant 8 : index
    %56 = vector.load %arg11[%c0_20, %c8] : memref<16x32xbf16, #tpu.memory_space<vmem>>, vector<16x8xbf16>
    tpu.vector_store %arg11[%c0_20, %c8], %55 {strides = array<i32>} : memref<16x32xbf16, #tpu.memory_space<vmem>>, vector<16x8xbf16>,
    %57 = vector.extract_strided_slice %17 {offsets = [0, 16], sizes = [16, 8], strides = [1, 1]} : vector<16x96xbf16> to vector<16x8xbf16>
    %58 = vector.extract_strided_slice %17 {offsets = [0, 48], sizes = [16, 8], strides = [1, 1]} : vector<16x96xbf16> to vector<16x8xbf16>
    %59 = vector.extract_strided_slice %17 {offsets = [0, 80], sizes = [16, 8], strides = [1, 1]} : vector<16x96xbf16> to vector<16x8xbf16>
    %cst_21 = arith.constant dense<0.000000e+00> : vector<16x16xf32>
    %60 = tpu.matmul %57, %58, %cst_21 {dimension_numbers = #tpu.dot_dimension_numbers<[1], [1], [0], [0], [0, 0, 1, 0], [], []>} : vector<16x8xbf16>, vector<16x8xbf16>, vector<16x16xf32> -> vector<16x16xf32>
    %61 = arith.addf %60, %18 : vector<16x16xf32>
    %cst_22 = arith.constant dense<0xFF800000> : vector<16xf32>
    %62 = vector.multi_reduction <maximumf>, %61, %cst_22 [1] : vector<16x16xf32> to vector<16xf32>
    %63 = vector.shape_cast %62 : vector<16xf32> to vector<16x1xf32>
    %64 = vector.broadcast %63 : vector<16x1xf32> to vector<16x16xf32>
    %65 = arith.subf %61, %64 : vector<16x16xf32>
    %66 = math.exp %65 : vector<16x16xf32>
    %cst_23 = arith.constant dense<0.000000e+00> : vector<16xf32>
    %67 = vector.multi_reduction <add>, %66, %cst_23 [1] : vector<16x16xf32> to vector<16xf32>
    %68 = vector.shape_cast %67 : vector<16xf32> to vector<16x1xf32>
    %69 = tpu.reciprocal %68 {approx = true} : vector<16x1xf32> -> vector<16x1xf32>
    %70 = vector.broadcast %69 : vector<16x1xf32> to vector<16x16xf32>
    %71 = arith.mulf %66, %70 : vector<16x16xf32>
    %72 = arith.truncf %71 : vector<16x16xf32> to vector<16x16xbf16>
    %cst_24 = arith.constant dense<0.000000e+00> : vector<16x8xf32>
    %73 = tpu.matmul %72, %59, %cst_24 {dimension_numbers = #tpu.dot_dimension_numbers<[1], [0], [0], [1], [0, 0, 1, 1], [], []>} : vector<16x16xbf16>, vector<16x8xbf16>, vector<16x8xf32> -> vector<16x8xf32>
    %74 = arith.truncf %73 : vector<16x8xf32> to vector<16x8xbf16>
    %c0_25 = arith.constant 0 : index
    %c16 = arith.constant 16 : index
    %75 = vector.load %arg11[%c0_25, %c16] : memref<16x32xbf16, #tpu.memory_space<vmem>>, vector<16x8xbf16>
    tpu.vector_store %arg11[%c0_25, %c16], %74 {strides = array<i32>} : memref<16x32xbf16, #tpu.memory_space<vmem>>, vector<16x8xbf16>,
    %76 = vector.extract_strided_slice %17 {offsets = [0, 24], sizes = [16, 8], strides = [1, 1]} : vector<16x96xbf16> to vector<16x8xbf16>
    %77 = vector.extract_strided_slice %17 {offsets = [0, 56], sizes = [16, 8], strides = [1, 1]} : vector<16x96xbf16> to vector<16x8xbf16>
    %78 = vector.extract_strided_slice %17 {offsets = [0, 88], sizes = [16, 8], strides = [1, 1]} : vector<16x96xbf16> to vector<16x8xbf16>
    %cst_26 = arith.constant dense<0.000000e+00> : vector<16x16xf32>
    %79 = tpu.matmul %76, %77, %cst_26 {dimension_numbers = #tpu.dot_dimension_numbers<[1], [1], [0], [0], [0, 0, 1, 0], [], []>} : vector<16x8xbf16>, vector<16x8xbf16>, vector<16x16xf32> -> vector<16x16xf32>
    %80 = arith.addf %79, %18 : vector<16x16xf32>
    %cst_27 = arith.constant dense<0xFF800000> : vector<16xf32>
    %81 = vector.multi_reduction <maximumf>, %80, %cst_27 [1] : vector<16x16xf32> to vector<16xf32>
    %82 = vector.shape_cast %81 : vector<16xf32> to vector<16x1xf32>
    %83 = vector.broadcast %82 : vector<16x1xf32> to vector<16x16xf32>
    %84 = arith.subf %80, %83 : vector<16x16xf32>
    %85 = math.exp %84 : vector<16x16xf32>
    %cst_28 = arith.constant dense<0.000000e+00> : vector<16xf32>
    %86 = vector.multi_reduction <add>, %85, %cst_28 [1] : vector<16x16xf32> to vector<16xf32>
    %87 = vector.shape_cast %86 : vector<16xf32> to vector<16x1xf32>
    %88 = tpu.reciprocal %87 {approx = true} : vector<16x1xf32> -> vector<16x1xf32>
    %89 = vector.broadcast %88 : vector<16x1xf32> to vector<16x16xf32>
    %90 = arith.mulf %85, %89 : vector<16x16xf32>
    %91 = arith.truncf %90 : vector<16x16xf32> to vector<16x16xbf16>
    %cst_29 = arith.constant dense<0.000000e+00> : vector<16x8xf32>
    %92 = tpu.matmul %91, %78, %cst_29 {dimension_numbers = #tpu.dot_dimension_numbers<[1], [0], [0], [1], [0, 0, 1, 1], [], []>} : vector<16x16xbf16>, vector<16x8xbf16>, vector<16x8xf32> -> vector<16x8xf32>
    %93 = arith.truncf %92 : vector<16x8xf32> to vector<16x8xbf16>
    %c0_30 = arith.constant 0 : index
    %c24 = arith.constant 24 : index
    %94 = vector.load %arg11[%c0_30, %c24] : memref<16x32xbf16, #tpu.memory_space<vmem>>, vector<16x8xbf16>
    tpu.vector_store %arg11[%c0_30, %c24], %93 {strides = array<i32>} : memref<16x32xbf16, #tpu.memory_space<vmem>>, vector<16x8xbf16>,
    %c0_31 = arith.constant 0 : index
    %c0_32 = arith.constant 0 : index
    %95 = vector.load %arg11[%c0_31, %c0_32] : memref<16x32xbf16, #tpu.memory_space<vmem>>, vector<16x32xbf16>
    %c0_33 = arith.constant 0 : index
    %c0_34 = arith.constant 0 : index
    %c0_35 = arith.constant 0 : index
    %96 = vector.load %arg5[%c0_33, %c0_34, %c0_35] : memref<1x32x32xbf16, #tpu.memory_space<vmem>>, vector<1x32x32xbf16>
    %97 = vector.shape_cast %96 : vector<1x32x32xbf16> to vector<32x32xbf16>
    %cst_36 = arith.constant dense<0.000000e+00> : vector<16x32xf32>
    %98 = tpu.matmul %95, %97, %cst_36 {dimension_numbers = #tpu.dot_dimension_numbers<[1], [0], [0], [1], [0, 0, 1, 1], [], []>} : vector<16x32xbf16>, vector<32x32xbf16>, vector<16x32xf32> -> vector<16x32xf32>
    %99 = vector.broadcast %6 : vector<1x32xf32> to vector<16x32xf32>
    %100 = arith.addf %98, %99 : vector<16x32xf32>
    %101 = arith.addf %100, %3 : vector<16x32xf32>
    %cst_37 = arith.constant dense<0.000000e+00> : vector<16xf32>
    %102 = vector.multi_reduction <add>, %101, %cst_37 [1] : vector<16x32xf32> to vector<16xf32>
    %103 = vector.shape_cast %102 : vector<16xf32> to vector<16x1xf32>
    %cst_38 = arith.constant 3.200000e+01 : f32
    %104 = vector.broadcast %cst_38 : f32 to vector<16x1xf32>
    %105 = arith.divf %103, %104 : vector<16x1xf32>
    %106 = vector.broadcast %105 : vector<16x1xf32> to vector<16x32xf32>
    %107 = arith.subf %101, %106 : vector<16x32xf32>
    %108 = arith.mulf %107, %107 : vector<16x32xf32>
    %cst_39 = arith.constant dense<0.000000e+00> : vector<16xf32>
    %109 = vector.multi_reduction <add>, %108, %cst_39 [1] : vector<16x32xf32> to vector<16xf32>
    %110 = vector.shape_cast %109 : vector<16xf32> to vector<16x1xf32>
    %cst_40 = arith.constant 3.200000e+01 : f32
    %111 = vector.broadcast %cst_40 : f32 to vector<16x1xf32>
    %112 = arith.divf %110, %111 : vector<16x1xf32>
    %113 = vector.broadcast %105 : vector<16x1xf32> to vector<16x32xf32>
    %114 = arith.subf %101, %113 : vector<16x32xf32>
    %cst_41 = arith.constant 9.99999974E-6 : f32
    %115 = vector.broadcast %cst_41 : f32 to vector<16x1xf32>
    %116 = arith.addf %112, %115 : vector<16x1xf32>
    %117 = math.rsqrt %116 : vector<16x1xf32>
    %118 = vector.broadcast %117 : vector<16x1xf32> to vector<16x32xf32>
    %119 = arith.mulf %114, %118 : vector<16x32xf32>
    %120 = vector.broadcast %7 : vector<1x32xf32> to vector<16x32xf32>
    %121 = arith.mulf %119, %120 : vector<16x32xf32>
    %122 = vector.broadcast %8 : vector<1x32xf32> to vector<16x32xf32>
    %123 = arith.addf %121, %122 : vector<16x32xf32>
    %124 = arith.truncf %123 : vector<16x32xf32> to vector<16x32xbf16>
    %c0_42 = arith.constant 0 : index
    %c0_43 = arith.constant 0 : index
    %c0_44 = arith.constant 0 : index
    %125 = vector.load %arg6[%c0_42, %c0_43, %c0_44] : memref<1x32x128xbf16, #tpu.memory_space<vmem>>, vector<1x32x128xbf16>
    %126 = vector.shape_cast %125 : vector<1x32x128xbf16> to vector<32x128xbf16>
    %cst_45 = arith.constant dense<0.000000e+00> : vector<16x128xf32>
    %127 = tpu.matmul %124, %126, %cst_45 {dimension_numbers = #tpu.dot_dimension_numbers<[1], [0], [0], [1], [0, 0, 1, 1], [], []>} : vector<16x32xbf16>, vector<32x128xbf16>, vector<16x128xf32> -> vector<16x128xf32>
    %128 = vector.broadcast %12 : vector<1x128xf32> to vector<16x128xf32>
    %129 = arith.addf %127, %128 : vector<16x128xf32>
    %cst_46 = arith.constant 0.000000e+00 : f32
    %130 = vector.broadcast %cst_46 : f32 to vector<16x128xf32>
    %131 = arith.maximumf %129, %130 : vector<16x128xf32>
    %132 = arith.truncf %131 : vector<16x128xf32> to vector<16x128xbf16>
    %c0_47 = arith.constant 0 : index
    %c0_48 = arith.constant 0 : index
    %c0_49 = arith.constant 0 : index
    %133 = vector.load %arg7[%c0_47, %c0_48, %c0_49] : memref<1x128x32xbf16, #tpu.memory_space<vmem>>, vector<1x128x32xbf16>
    %134 = vector.shape_cast %133 : vector<1x128x32xbf16> to vector<128x32xbf16>
    %cst_50 = arith.constant dense<0.000000e+00> : vector<16x32xf32>
    %135 = tpu.matmul %132, %134, %cst_50 {dimension_numbers = #tpu.dot_dimension_numbers<[1], [0], [0], [1], [0, 0, 1, 1], [], []>} : vector<16x128xbf16>, vector<128x32xbf16>, vector<16x32xf32> -> vector<16x32xf32>
    %136 = vector.broadcast %9 : vector<1x32xf32> to vector<16x32xf32>
    %137 = arith.addf %135, %136 : vector<16x32xf32>
    %138 = arith.addf %137, %123 : vector<16x32xf32>
    %cst_51 = arith.constant dense<0.000000e+00> : vector<16xf32>
    %139 = vector.multi_reduction <add>, %138, %cst_51 [1] : vector<16x32xf32> to vector<16xf32>
    %140 = vector.shape_cast %139 : vector<16xf32> to vector<16x1xf32>
    %cst_52 = arith.constant 3.200000e+01 : f32
    %141 = vector.broadcast %cst_52 : f32 to vector<16x1xf32>
    %142 = arith.divf %140, %141 : vector<16x1xf32>
    %143 = vector.broadcast %142 : vector<16x1xf32> to vector<16x32xf32>
    %144 = arith.subf %138, %143 : vector<16x32xf32>
    %145 = arith.mulf %144, %144 : vector<16x32xf32>
    %cst_53 = arith.constant dense<0.000000e+00> : vector<16xf32>
    %146 = vector.multi_reduction <add>, %145, %cst_53 [1] : vector<16x32xf32> to vector<16xf32>
    %147 = vector.shape_cast %146 : vector<16xf32> to vector<16x1xf32>
    %cst_54 = arith.constant 3.200000e+01 : f32
    %148 = vector.broadcast %cst_54 : f32 to vector<16x1xf32>
    %149 = arith.divf %147, %148 : vector<16x1xf32>
    %150 = vector.broadcast %142 : vector<16x1xf32> to vector<16x32xf32>
    %151 = arith.subf %138, %150 : vector<16x32xf32>
    %cst_55 = arith.constant 9.99999974E-6 : f32
    %152 = vector.broadcast %cst_55 : f32 to vector<16x1xf32>
    %153 = arith.addf %149, %152 : vector<16x1xf32>
    %154 = math.rsqrt %153 : vector<16x1xf32>
    %155 = vector.broadcast %154 : vector<16x1xf32> to vector<16x32xf32>
    %156 = arith.mulf %151, %155 : vector<16x32xf32>
    %157 = vector.broadcast %10 : vector<1x32xf32> to vector<16x32xf32>
    %158 = arith.mulf %156, %157 : vector<16x32xf32>
    %159 = vector.broadcast %11 : vector<1x32xf32> to vector<16x32xf32>
    %160 = arith.addf %158, %159 : vector<16x32xf32>
    %c0_56 = arith.constant 0 : index
    %c0_57 = arith.constant 0 : index
    %161 = vector.load %arg9[%c0_56, %c0_57] : memref<16x32xf32, #tpu.memory_space<vmem>>, vector<16x32xf32>
    tpu.vector_store %arg9[%c0_56, %c0_57], %160 {strides = array<i32>} : memref<16x32xf32, #tpu.memory_space<vmem>>, vector<16x32xf32>,
    return
  }
  func.func @transform_0(%arg0: i32) -> (i32, i32) {
    %c0_i32 = arith.constant 0 : i32
    %c0_i32_0 = arith.constant 0 : i32
    %c0_i32_1 = arith.constant 0 : i32
    return %c0_i32, %c0_i32_0 : i32, i32
  }
  func.func @transform_1(%arg0: i32) -> (i32, i32) {
    %c0_i32 = arith.constant 0 : i32
    %c0_i32_0 = arith.constant 0 : i32
    %c0_i32_1 = arith.constant 0 : i32
    return %c0_i32, %c0_i32_0 : i32, i32
  }
  func.func @transform_3(%arg0: i32) -> (i32, i32, i32) {
    %c0_i32 = arith.constant 0 : i32
    %c0_i32_0 = arith.constant 0 : i32
    %c0_i32_1 = arith.constant 0 : i32
    return %arg0, %c0_i32, %c0_i32_0 : i32, i32, i32
  }
  func.func @transform_4(%arg0: i32) -> (i32, i32, i32) {
    %c0_i32 = arith.constant 0 : i32
    %c0_i32_0 = arith.constant 0 : i32
    %c0_i32_1 = arith.constant 0 : i32
    return %arg0, %c0_i32, %c0_i32_0 : i32, i32, i32
  }
  func.func @transform_5(%arg0: i32) -> (i32, i32, i32) {
    %c0_i32 = arith.constant 0 : i32
    %c0_i32_0 = arith.constant 0 : i32
    %c0_i32_1 = arith.constant 0 : i32
    return %arg0, %c0_i32, %c0_i32_0 : i32, i32, i32
  }
  func.func @transform_6(%arg0: i32) -> (i32, i32, i32) {
    %c0_i32 = arith.constant 0 : i32
    %c0_i32_0 = arith.constant 0 : i32
    %c0_i32_1 = arith.constant 0 : i32
    return %arg0, %c0_i32, %c0_i32_0 : i32, i32, i32
  }
  func.func @transform_7(%arg0: i32) -> (i32, i32, i32) {
    %c0_i32 = arith.constant 0 : i32
    %c0_i32_0 = arith.constant 0 : i32
    %c0_i32_1 = arith.constant 0 : i32
    return %arg0, %c0_i32, %c0_i32_0 : i32, i32, i32
  }
  func.func @transform_8(%arg0: i32) -> (i32, i32) {
    %c0_i32 = arith.constant 0 : i32
    %c0_i32_0 = arith.constant 0 : i32
    %c0_i32_1 = arith.constant 0 : i32
    return %c0_i32, %c0_i32_0 : i32, i32
  }
}

</mosaic_0001>

<llo_original>
// kernel: tpu_custom_call.1
$region0: #{tpu_custom_call.1}
  #allocation0 [shape = 'u32[]', space=smem, size = 0x4, offset = 0x4, fixed_abs, tag = 'smem constant byte address 0x4 - core index']
  #allocation1 [shape = 'u32[144,128]{1,0:T(1,128)}', space=vmem, size = 0x12000, scoped, tag = 'internal scratch']
  #allocation2 [shape = 'f32[16,16]{1,0:T(8,128)}', space=vmem, size = 0x2000, scoped, tag = 'scratch operand']
  #allocation3 [shape = 'bf16[16,32]{1,0:T(8,128)(2,1)}', space=vmem, size = 0x1000, scoped, tag = 'scratch operand']
  #allocation4 [shape = 's32[1]{0}', space=sflag, size = 0x4, scoped, tag = 'scratch operand']
  #allocation7 [shape = 's32[]', space=sflag, size = 0x4, offset = 0, fixed_abs, tag = 'sflag constant byte address 0x0 - dummy sync flag']
  %s0 = inlined_call_operand.vmem [shape: f32[16,1], index: 0, kind: input, shape index: {}]
  %s1 = inlined_call_operand.vmem [shape: f32[1,16], index: 1, kind: input, shape index: {}]
  %s2 = inlined_call_operand.vmem [shape: f32[16,32], index: 2, kind: input, shape index: {}]
  %s3 = inlined_call_operand.vmem [shape: bf16[2,32,96], index: 3, kind: input, shape index: {}]
  %s4 = inlined_call_operand.vmem [shape: bf16[2,32,32], index: 4, kind: input, shape index: {}]
  %s5 = inlined_call_operand.vmem [shape: bf16[2,32,128], index: 5, kind: input, shape index: {}]
  %s6 = inlined_call_operand.vmem [shape: bf16[2,128,32], index: 6, kind: input, shape index: {}]
  %s7 = inlined_call_operand.vmem [shape: f32[2,8,128], index: 7, kind: input, shape index: {}]
  %s8 = inlined_call_operand.hbm [shape: f32[16,32], index: 8, kind: output, shape index: {}]
  %s9 = sld [smem:[#allocation0]]
  $region99: #{tpu_custom_call.1} parent=0
    _
  %s11 = ssub.s32 1, %s9
  %s12 = scalar_select 0, %s11, %s9
  $region1: #{tpu_custom_call.1} parent=0
    #allocation5 [shape = 'u8[8192]{0}', space=vmem, size = 0x2000, scoped, tag = 'output window, operand 0, single buffered']
    #allocation6 [shape = 's32[2]{0}', space=sflag, size = 0x8, scoped, tag = 'scoped memory for tpu_custom_call.1']
    %13 = vsyncpa [#allocation6], 0
    loop: start=0, step=1, limit=4
    $region2: #{tpu_custom_call.1} parent=1 // loop_pre_header
      _
    $region3: #{tpu_custom_call.1} parent=1 // loop_header
      %s15 = sphi 0, %s19
      %p16 = scmp.ge.s32.totalorder %s15, 4
      %s23 = sphi 0, %s23
      %s25 = sphi 0, %s23
      %s26 = sphi 0, %s25
      %s40 = sphi 0, %s26
      %s44 = sphi 0, %s44
      %s46 = sphi 0, %s44
      %s47 = sphi 0, %s46
      %s61 = sphi 0, %s47
      %s67 = sphi 0, %s69
      %s70 = sphi 0, %s67
      %s71 = sphi 0, %s70
      %s87 = sphi 0, %s71
      %s93 = sphi 0, %s95
      %s96 = sphi 0, %s93
      %s97 = sphi 0, %s96
      %s113 = sphi 0, %s97
      %s119 = sphi 0, %s121
      %s122 = sphi 0, %s119
      %s123 = sphi 0, %s122
      %s139 = sphi 0, %s123
      %s145 = sphi 0, %s147
      %s148 = sphi 0, %s145
      %s149 = sphi 0, %s148
      %s165 = sphi 0, %s149
      %s171 = sphi 0, %s173
      %s174 = sphi 0, %s171
      %s175 = sphi 0, %s174
      %s191 = sphi 0, %s175
      %s195 = sphi 0, %s195
      %s197 = sphi 0, %s195
      %s198 = sphi 0, %s197
      %s212 = sphi 0, %s198
    $region4: #{tpu_custom_call.1} parent=1 // loop_header_branch
      %18 = sbr.rel (%p16) target = $region8
    $region5: #{tpu_custom_call.1} parent=1 // loop_body
      %s20 = ssub.s32 %s15, 1
      %s21 = ssub.s32 %s15, 2
      %s22 = sadd.s32 %s15, 1
      %s24 = sadd.s32 %s23, 1
      %p27 = scmp.eq.s32.totalorder %s15, 1
      %p28 = scmp.ne.s32.totalorder %s23, %s25
      %p29 = scmp.eq.s32.totalorder %s15, 0
      %p30 = por %p28, %p29
      %p31 = scmp.ne.s32.totalorder %s23, %s25
      %p32 = scmp.eq.s32.totalorder %s20, 1
      %p33 = por %p31, %p32
      %p34 = scmp.ne.s32.totalorder %s25, %s26
      %p35 = scmp.eq.s32.totalorder %s20, 0
      %p36 = por %p34, %p35
      %p37 = scmp.ne.s32.totalorder %s25, %s26
      %p38 = scmp.eq.s32.totalorder %s21, 1
      %p39 = por %p37, %p38
      %p41 = scmp.ne.s32.totalorder %s26, %s40
      %p42 = scmp.eq.s32.totalorder %s21, 0
      %p43 = por %p41, %p42
      %s45 = sadd.s32 %s44, 1
      %p48 = scmp.eq.s32.totalorder %s15, 1
      %p49 = scmp.ne.s32.totalorder %s44, %s46
      %p50 = scmp.eq.s32.totalorder %s15, 0
      %p51 = por %p49, %p50
      %p52 = scmp.ne.s32.totalorder %s44, %s46
      %p53 = scmp.eq.s32.totalorder %s20, 1
      %p54 = por %p52, %p53
      %p55 = scmp.ne.s32.totalorder %s46, %s47
      %p56 = scmp.eq.s32.totalorder %s20, 0
      %p57 = por %p55, %p56
      %p58 = scmp.ne.s32.totalorder %s46, %s47
      %p59 = scmp.eq.s32.totalorder %s21, 1
      %p60 = por %p58, %p59
      %p62 = scmp.ne.s32.totalorder %s47, %s61
      %p63 = scmp.eq.s32.totalorder %s21, 0
      %p64 = por %p62, %p63
      %s65 = ssub.s32 %s15, %s22
      %p66 = scmp.eq.s32.totalorder %s65, 0
      %s68 = sadd.s32 %s67, 1
      %s69 = scalar_select %p66, %s67, %s68
      %p72 = pneg %p66
      %p73 = scmp.eq.s32.totalorder %s15, 1
      %p74 = por %p72, %p73
      %p75 = scmp.ne.s32.totalorder %s67, %s70
      %p76 = scmp.eq.s32.totalorder %s15, 0
      %p77 = por %p75, %p76
      %p78 = scmp.ne.s32.totalorder %s67, %s70
      %p79 = scmp.eq.s32.totalorder %s20, 1
      %p80 = por %p78, %p79
      %p81 = scmp.ne.s32.totalorder %s70, %s71
      %p82 = scmp.eq.s32.totalorder %s20, 0
      %p83 = por %p81, %p82
      %p84 = scmp.ne.s32.totalorder %s70, %s71
      %p85 = scmp.eq.s32.totalorder %s21, 1
      %p86 = por %p84, %p85
      %p88 = scmp.ne.s32.totalorder %s71, %s87
      %p89 = scmp.eq.s32.totalorder %s21, 0
      %p90 = por %p88, %p89
      %s91 = ssub.s32 %s15, %s22
      %p92 = scmp.eq.s32.totalorder %s91, 0
      %s94 = sadd.s32 %s93, 1
      %s95 = scalar_select %p92, %s93, %s94
      %p98 = pneg %p92
      %p99 = scmp.eq.s32.totalorder %s15, 1
      %p100 = por %p98, %p99
      %p101 = scmp.ne.s32.totalorder %s93, %s96
      %p102 = scmp.eq.s32.totalorder %s15, 0
      %p103 = por %p101, %p102
      %p104 = scmp.ne.s32.totalorder %s93, %s96
      %p105 = scmp.eq.s32.totalorder %s20, 1
      %p106 = por %p104, %p105
      %p107 = scmp.ne.s32.totalorder %s96, %s97
      %p108 = scmp.eq.s32.totalorder %s20, 0
      %p109 = por %p107, %p108
      %p110 = scmp.ne.s32.totalorder %s96, %s97
      %p111 = scmp.eq.s32.totalorder %s21, 1
      %p112 = por %p110, %p111
      %p114 = scmp.ne.s32.totalorder %s97, %s113
      %p115 = scmp.eq.s32.totalorder %s21, 0
      %p116 = por %p114, %p115
      %s117 = ssub.s32 %s15, %s22
      %p118 = scmp.eq.s32.totalorder %s117, 0
      %s120 = sadd.s32 %s119, 1
      %s121 = scalar_select %p118, %s119, %s120
      %p124 = pneg %p118
      %p125 = scmp.eq.s32.totalorder %s15, 1
      %p126 = por %p124, %p125
      %p127 = scmp.ne.s32.totalorder %s119, %s122
      %p128 = scmp.eq.s32.totalorder %s15, 0
      %p129 = por %p127, %p128
      %p130 = scmp.ne.s32.totalorder %s119, %s122
      %p131 = scmp.eq.s32.totalorder %s20, 1
      %p132 = por %p130, %p131
      %p133 = scmp.ne.s32.totalorder %s122, %s123
      %p134 = scmp.eq.s32.totalorder %s20, 0
      %p135 = por %p133, %p134
      %p136 = scmp.ne.s32.totalorder %s122, %s123
      %p137 = scmp.eq.s32.totalorder %s21, 1
      %p138 = por %p136, %p137
      %p140 = scmp.ne.s32.totalorder %s123, %s139
      %p141 = scmp.eq.s32.totalorder %s21, 0
      %p142 = por %p140, %p141
      %s143 = ssub.s32 %s15, %s22
      %p144 = scmp.eq.s32.totalorder %s143, 0
      %s146 = sadd.s32 %s145, 1
      %s147 = scalar_select %p144, %s145, %s146
      %p150 = pneg %p144
      %p151 = scmp.eq.s32.totalorder %s15, 1
      %p152 = por %p150, %p151
      %p153 = scmp.ne.s32.totalorder %s145, %s148
      %p154 = scmp.eq.s32.totalorder %s15, 0
      %p155 = por %p153, %p154
      %p156 = scmp.ne.s32.totalorder %s145, %s148
      %p157 = scmp.eq.s32.totalorder %s20, 1
      %p158 = por %p156, %p157
      %p159 = scmp.ne.s32.totalorder %s148, %s149
      %p160 = scmp.eq.s32.totalorder %s20, 0
      %p161 = por %p159, %p160
      %p162 = scmp.ne.s32.totalorder %s148, %s149
      %p163 = scmp.eq.s32.totalorder %s21, 1
      %p164 = por %p162, %p163
      %p166 = scmp.ne.s32.totalorder %s149, %s165
      %p167 = scmp.eq.s32.totalorder %s21, 0
      %p168 = por %p166, %p167
      %s169 = ssub.s32 %s15, %s22
      %p170 = scmp.eq.s32.totalorder %s169, 0
      %s172 = sadd.s32 %s171, 1
      %s173 = scalar_select %p170, %s171, %s172
      %p176 = pneg %p170
      %p177 = scmp.eq.s32.totalorder %s15, 1
      %p178 = por %p176, %p177
      %p179 = scmp.ne.s32.totalorder %s171, %s174
      %p180 = scmp.eq.s32.totalorder %s15, 0
      %p181 = por %p179, %p180
      %p182 = scmp.ne.s32.totalorder %s171, %s174
      %p183 = scmp.eq.s32.totalorder %s20, 1
      %p184 = por %p182, %p183
      %p185 = scmp.ne.s32.totalorder %s174, %s175
      %p186 = scmp.eq.s32.totalorder %s20, 0
      %p187 = por %p185, %p186
      %p188 = scmp.ne.s32.totalorder %s174, %s175
      %p189 = scmp.eq.s32.totalorder %s21, 1
      %p190 = por %p188, %p189
      %p192 = scmp.ne.s32.totalorder %s175, %s191
      %p193 = scmp.eq.s32.totalorder %s21, 0
      %p194 = por %p192, %p193
      %s196 = sadd.s32 %s195, 1
      %p199 = scmp.eq.s32.totalorder %s15, 1
      %p200 = scmp.ne.s32.totalorder %s195, %s197
      %p201 = scmp.eq.s32.totalorder %s15, 0
      %p202 = por %p200, %p201
      %p203 = scmp.ne.s32.totalorder %s195, %s197
      %p204 = scmp.eq.s32.totalorder %s20, 1
      %p205 = por %p203, %p204
      %p206 = scmp.ne.s32.totalorder %s197, %s198
      %p207 = scmp.eq.s32.totalorder %s20, 0
      %p208 = por %p206, %p207
      %p209 = scmp.ne.s32.totalorder %s197, %s198
      %p210 = scmp.eq.s32.totalorder %s21, 1
      %p211 = por %p209, %p210
      %p213 = scmp.ne.s32.totalorder %s198, %s212
      %p214 = scmp.eq.s32.totalorder %s21, 0
      %p215 = por %p213, %p214
      %p216 = scmp.le.s32.totalorder 1, %s15
      %p217 = scmp.lt.s32.totalorder %s15, 3
      %p218 = pnand %p216, %p217
      %p219 = pneg %p218
      // Predicated region
      $region9: #{tpu_custom_call.1} parent=5 // pred_check
        _
      $region10: #{tpu_custom_call.1} parent=5 // pred_check_branch
        %221 = sbr.rel (%p218) target = $region12
      $region11: #{tpu_custom_call.1} parent=5 // pred_region
        %s222 = ssub.s32 %s15, 1
        // Predicated region
        $region13: #{tpu_custom_call.1} parent=11 // pred_check
          %p223 = pneg %p36
        $region14: #{tpu_custom_call.1} parent=11 // pred_check_branch
          %225 = sbr.rel (%p223) target = $region16
        $region15: #{tpu_custom_call.1} parent=11 // pred_region
          _
        $region16: #{tpu_custom_call.1} parent=11 // pred_fallthru
          _
        // Predicated region
        $region17: #{tpu_custom_call.1} parent=11 // pred_check
          %p226 = pneg %p57
        $region18: #{tpu_custom_call.1} parent=11 // pred_check_branch
          %228 = sbr.rel (%p226) target = $region20
        $region19: #{tpu_custom_call.1} parent=11 // pred_region
          _
        $region20: #{tpu_custom_call.1} parent=11 // pred_fallthru
          _
      $region12: #{tpu_custom_call.1} parent=5 // pred_fallthru
        _
      %p229 = scmp.lt.s32.totalorder %s15, 2
      // Predicated region
      $region21: #{tpu_custom_call.1} parent=5 // pred_check
        %p230 = pneg %p229
      $region22: #{tpu_custom_call.1} parent=5 // pred_check_branch
        %232 = sbr.rel (%p230) target = $region24
      $region23: #{tpu_custom_call.1} parent=5 // pred_region
        // Predicated region
        $region25: #{tpu_custom_call.1} parent=23 // pred_check
          %p233 = pneg %p77
        $region26: #{tpu_custom_call.1} parent=23 // pred_check_branch
          %235 = sbr.rel (%p233) target = $region28
        $region27: #{tpu_custom_call.1} parent=23 // pred_region
          %p236 = scmp.lt.s32.totalorder %s15, 1
          %s237 = scalar_select %p236, %s15, 1
          %s238 = smul.addr %s237, 4
          %s239 = smul.addr %s238, 4
          %s240 = scalar_lea.vmem %s3, %s239
        $region28: #{tpu_custom_call.1} parent=23 // pred_fallthru
          _
        // Predicated region
        $region29: #{tpu_custom_call.1} parent=23 // pred_check
          %p241 = pneg %p103
        $region30: #{tpu_custom_call.1} parent=23 // pred_check_branch
          %243 = sbr.rel (%p241) target = $region32
        $region31: #{tpu_custom_call.1} parent=23 // pred_region
          %p244 = scmp.lt.s32.totalorder %s15, 1
          %s245 = scalar_select %p244, %s15, 1
          %s246 = smul.addr %s245, 4
          %s247 = smul.addr %s246, 4
          %s248 = scalar_lea.vmem %s4, %s247
        $region32: #{tpu_custom_call.1} parent=23 // pred_fallthru
          _
        // Predicated region
        $region33: #{tpu_custom_call.1} parent=23 // pred_check
          %p249 = pneg %p129
        $region34: #{tpu_custom_call.1} parent=23 // pred_check_branch
          %251 = sbr.rel (%p249) target = $region36
        $region35: #{tpu_custom_call.1} parent=23 // pred_region
          %p252 = scmp.lt.s32.totalorder %s15, 1
          %s253 = scalar_select %p252, %s15, 1
          %s254 = smul.addr %s253, 4
          %s255 = smul.addr %s254, 4
          %s256 = scalar_lea.vmem %s5, %s255
        $region36: #{tpu_custom_call.1} parent=23 // pred_fallthru
          _
        // Predicated region
        $region37: #{tpu_custom_call.1} parent=23 // pred_check
          %p257 = pneg %p155
        $region38: #{tpu_custom_call.1} parent=23 // pred_check_branch
          %259 = sbr.rel (%p257) target = $region40
        $region39: #{tpu_custom_call.1} parent=23 // pred_region
          %p260 = scmp.lt.s32.totalorder %s15, 1
          %s261 = scalar_select %p260, %s15, 1
          %s262 = smul.addr %s261, 16
          %s263 = smul.addr %s262, 4
          %s264 = scalar_lea.vmem %s6, %s263
        $region40: #{tpu_custom_call.1} parent=23 // pred_fallthru
          _
        // Predicated region
        $region41: #{tpu_custom_call.1} parent=23 // pred_check
          %p265 = pneg %p181
        $region42: #{tpu_custom_call.1} parent=23 // pred_check_branch
          %267 = sbr.rel (%p265) target = $region44
        $region43: #{tpu_custom_call.1} parent=23 // pred_region
          %p268 = scmp.lt.s32.totalorder %s15, 1
          %s269 = scalar_select %p268, %s15, 1
          %s270 = smul.addr %s269, 8
          %s271 = scalar_lea.vmem %s7, %s270
        $region44: #{tpu_custom_call.1} parent=23 // pred_fallthru
          _
      $region24: #{tpu_custom_call.1} parent=5 // pred_fallthru
        _
      %p272 = scmp.le.s32.totalorder 1, %s15
      %p273 = scmp.lt.s32.totalorder %s15, 3
      %p274 = pnand %p272, %p273
      %p275 = pneg %p274
      // Predicated region
      $region45: #{tpu_custom_call.1} parent=5 // pred_check
        _
      $region46: #{tpu_custom_call.1} parent=5 // pred_check_branch
        %277 = sbr.rel (%p274) target = $region48
      $region47: #{tpu_custom_call.1} parent=5 // pred_region
        %s278 = ssub.s32 %s15, 1
        %p279 = pneg %p36
        %p280 = pneg %p33
        %p281 = pneg %p57
        %p282 = pneg %p54
        %p283 = scmp.lt.s32.totalorder %s20, 1
        %s284 = scalar_select %p283, %s20, 1
        %s285 = smul.addr %s284, 4
        %s286 = smul.addr %s285, 4
        %s287 = scalar_lea.vmem %s3, %s286
        %p288 = pneg %p83
        %p289 = pneg %p80
        %p290 = scmp.lt.s32.totalorder %s20, 1
        %s291 = scalar_select %p290, %s20, 1
        %s292 = smul.addr %s291, 4
        %s293 = smul.addr %s292, 4
        %s294 = scalar_lea.vmem %s4, %s293
        %p295 = pneg %p109
        %p296 = pneg %p106
        %p297 = scmp.lt.s32.totalorder %s20, 1
        %s298 = scalar_select %p297, %s20, 1
        %s299 = smul.addr %s298, 4
        %s300 = smul.addr %s299, 4
        %s301 = scalar_lea.vmem %s5, %s300
        %p302 = pneg %p135
        %p303 = pneg %p132
        %p304 = scmp.lt.s32.totalorder %s20, 1
        %s305 = scalar_select %p304, %s20, 1
        %s306 = smul.addr %s305, 16
        %s307 = smul.addr %s306, 4
        %s308 = scalar_lea.vmem %s6, %s307
        %p309 = pneg %p161
        %p310 = pneg %p158
        %p311 = scmp.lt.s32.totalorder %s20, 1
        %s312 = scalar_select %p311, %s20, 1
        %s313 = smul.addr %s312, 8
        %s314 = scalar_lea.vmem %s7, %s313
        %p315 = pneg %p187
        %p316 = pneg %p184
        %p317 = pneg %p208
        %p318 = pneg %p205
        %p319 = scmp.lt.s32.totalorder %s20, 1
        %s320 = scalar_select %p319, %s20, 1
        %s321 = smul.addr %s320, 4
        %s322 = smul.addr %s321, 4
        %s323 = scalar_lea.vmem %s3, %s322
        %p324 = scmp.lt.s32.totalorder %s20, 1
        %s325 = scalar_select %p324, %s20, 1
        %s326 = smul.addr %s325, 4
        %s327 = smul.addr %s326, 4
        %s328 = scalar_lea.vmem %s4, %s327
        %p329 = scmp.lt.s32.totalorder %s20, 1
        %s330 = scalar_select %p329, %s20, 1
        %s331 = smul.addr %s330, 4
        %s332 = smul.addr %s331, 4
        %s333 = scalar_lea.vmem %s5, %s332
        %p334 = scmp.lt.s32.totalorder %s20, 1
        %s335 = scalar_select %p334, %s20, 1
        %s336 = smul.addr %s335, 16
        %s337 = smul.addr %s336, 4
        %s338 = scalar_lea.vmem %s6, %s337
        %p339 = scmp.lt.s32.totalorder %s20, 1
        %s340 = scalar_select %p339, %s20, 1
        %s341 = smul.addr %s340, 8
        %s342 = scalar_lea.vmem %s7, %s341
        %p344 = scmp.eq.s32.totalorder %s20, 0
        // Predicated region
        $region49: #{tpu_custom_call.1} parent=47 // pred_check
          %p345 = pneg %p344
        $region50: #{tpu_custom_call.1} parent=47 // pred_check_branch
          %347 = sbr.rel (%p345) target = $region52
        $region51: #{tpu_custom_call.1} parent=47 // pred_region
          %p349 = scmp.lt.u32.totalorder 16, 8
          %p350 = pneg %p349
          // Predicated region
          $region53: #{tpu_custom_call.1} parent=51 // pred_check
            _
          $region54: #{tpu_custom_call.1} parent=51 // pred_check_branch
            %352 = sbr.rel (%p349) target = $region56
          $region55: #{tpu_custom_call.1} parent=51 // pred_region
            %s368 = sand.u32 16, 7
            %p369 = scmp.eq.s32.totalorder %s368, 0
            // Predicated region
            $region68: #{tpu_custom_call.1} parent=55 // pred_check
              %p370 = pneg %p369
            $region69: #{tpu_custom_call.1} parent=55 // pred_check_branch
              %372 = sbr.rel (%p370) target = $region71
            $region70: #{tpu_custom_call.1} parent=55 // pred_region
              loop: start=0, step=1, limit=1
              $region72: #{tpu_custom_call.1} parent=70 // loop_pre_header
                _
              $region73: #{tpu_custom_call.1} parent=70 // loop_header
                %s374 = sphi 0, %s378
                %p375 = scmp.ge.s32.totalorder %s374, 1
                %s379 = sphi %s2, %s2
                %s380 = sphi [#allocation5], [#allocation5]
              $region74: #{tpu_custom_call.1} parent=70 // loop_header_branch
                %377 = sbr.rel (%p375) target = $region78
              $region75: #{tpu_custom_call.1} parent=70 // loop_body
                %v381 = vld [vmem:[%s379] sm:$0xff]
                %382 = vst [vmem:[%s380] sm:$0xff] %v381
                %v383 = vld [vmem:[%s379 + $0x8] sm:$0xff]
                %384 = vst [vmem:[%s380 + $0x8] sm:$0xff] %v383
              $region76: #{tpu_custom_call.1} parent=70 // loop_footer
                %s378 = sadd.s32 1, %s374
              $region77: #{tpu_custom_call.1} parent=70 // loop_footer_branch
                %373 = sbr.rel target = $region73
              $region78: #{tpu_custom_call.1} parent=70 // loop_exit
                _
            $region71: #{tpu_custom_call.1} parent=55 // pred_fallthru
              _
            %p385 = pneg %p369
            // Predicated region
            $region79: #{tpu_custom_call.1} parent=55 // pred_check
              _
            $region80: #{tpu_custom_call.1} parent=55 // pred_check_branch
              %387 = sbr.rel (%p369) target = $region82
            $region81: #{tpu_custom_call.1} parent=55 // pred_region
              %s388 = sand.u32 16, 7
            $region82: #{tpu_custom_call.1} parent=55 // pred_fallthru
              _
          $region56: #{tpu_custom_call.1} parent=51 // pred_fallthru
            _
          // Predicated region
          $region57: #{tpu_custom_call.1} parent=51 // pred_check
            %p353 = pneg %p349
          $region58: #{tpu_custom_call.1} parent=51 // pred_check_branch
            %355 = sbr.rel (%p353) target = $region60
          $region59: #{tpu_custom_call.1} parent=51 // pred_region
            %s356 = sshll.u32 1, 16
            %s357 = ssub.s32 %s356, 1
            loop: start=0, step=1, limit=1
            $region61: #{tpu_custom_call.1} parent=59 // loop_pre_header
              _
            $region62: #{tpu_custom_call.1} parent=59 // loop_header
              %s359 = sphi 0, %s363
              %p360 = scmp.ge.s32.totalorder %s359, 1
              %s364 = sphi %s2, %s2
              %s365 = sphi [#allocation5], [#allocation5]
            $region63: #{tpu_custom_call.1} parent=59 // loop_header_branch
              %362 = sbr.rel (%p360) target = $region67
            $region64: #{tpu_custom_call.1} parent=59 // loop_body
              %v366 = vld [vmem:[%s364] sm:%s357]
              %367 = vst [vmem:[%s365] sm:%s357] %v366
            $region65: #{tpu_custom_call.1} parent=59 // loop_footer
              %s363 = sadd.s32 1, %s359
            $region66: #{tpu_custom_call.1} parent=59 // loop_footer_branch
              %358 = sbr.rel target = $region62
            $region67: #{tpu_custom_call.1} parent=59 // loop_exit
              _
          $region60: #{tpu_custom_call.1} parent=51 // pred_fallthru
            _
          // Predicated region
          $region83: #{tpu_custom_call.1} parent=51 // pred_check
            _
          $region84: #{tpu_custom_call.1} parent=51 // pred_check_branch
            %391 = sbr.rel (0) target = $region86
          $region85: #{tpu_custom_call.1} parent=51 // pred_region
            %392 = vsyncadd [#allocation4], 256
          $region86: #{tpu_custom_call.1} parent=51 // pred_fallthru
            _
          %s393 = smul.u32 16, 1
          %s394 = sshll.u32 %s393, 4
          %395 = dma.done [#allocation4], %s394
          %v396 = vld [vmem:[%s0] sm:$0xff]
          %v397 = vld [vmem:[%s0 + $0x8] sm:$0xff]
          %v398 = vld [vmem:[%s1] sm:$0x1]
          %400 = vset.pattern.permute.xlu0 0
          %401 = vperm.xlu0 %400, %v396
          %v402 = vpop.permute.xlu0 %401
          %405 = vset.pattern.permute.xlu0 0
          %406 = vperm.xlu0 %405, %v397
          %v407 = vpop.permute.xlu0 %406
          %v410 = vlaneseq
          %v411 = vshrl.u32 %v410, 7
          %v412 = vsub.s32 0, %v411
          %v413 = vrot.slane %v398, %v412
          %vm415 = vcmp.eq.f32.partialorder %v402, %v413
          %vm416 = vcmp.eq.f32.partialorder %v407, %v413
          %v417 = vsel %vm415, 0.0, -1e+20
          %v418 = vsel %vm416, 0.0, -1e+20
          %vm419 = vcmask 130048
          %420 = vst.msk [vmem:[#allocation2] sm:$0xff] %vm419, %v417
          %421 = vst.msk [vmem:[#allocation2 + $0x8] sm:$0xff] %vm419, %v418
        $region52: #{tpu_custom_call.1} parent=47 // pred_fallthru
          _
        %v422 = vld [vmem:[#allocation5] sm:$0xff]
        %v423 = vld [vmem:[#allocation5 + $0x8] sm:$0xff]
        %v424 = vld [vmem:[%s342] sm:$0xff]
        %v425 = vpack.c.bf16 %v423, %v422
        %v426 = vld [vmem:[%s323] sm:$0xf]
        %v427 = vld [vmem:[%s323 + $0x4] sm:$0xf]
        %v428 = vld [vmem:[%s323 + $0x8] sm:$0xf]
        %v429 = vld [vmem:[%s323 + $0xc] sm:$0xf]
        %v434 = vunpack.c.l.b16 %v426
        %v435 = vunpack.c.l.b16 %v427
        %v436 = vunpack.c.l.b16 %v428
        %v437 = vunpack.c.l.b16 %v429
        %v438 = vpack.c.b16 %v435, %v434
        %v439 = vpack.c.b16 %v437, %v436
        %vm442 = vcmask 261120
        %v444 = vsel %vm442, %v425, 0
        %446 = vmatprep.subr.bf16.mxu0 0
        %447 = vmatpush1.bf16.msra.mxu0 0
        %448 = vmatprep.subr.bf16.mxu0 0
        %449 = vmatpush1.bf16.msra.mxu0 0
        %450 = vmatprep.subr.bf16.mxu0 0
        %451 = vmatpush1.bf16.msra.mxu0 0
        %452 = vmatprep.subr.bf16.mxu0 0
        %453 = vmatpush1.bf16.msra.mxu0 0
        %454 = vmatprep.subr.bf16.mxu0 0
        %455 = vmatpush1.bf16.msra.mxu0 0
        %456 = vmatprep.subr.bf16.mxu0 0
        %457 = vmatpush1.bf16.msra.mxu0 0
        %458 = vmatprep.subr.bf16.mxu0 0
        %459 = vmatpush1.bf16.msra.mxu0 %v439
        %460 = vmatprep.subr.bf16.mxu0 0
        %461 = vmatpush1.bf16.msra.mxu0 %v438
        %462 = vmatprep.subr.bf16.mxu0 0
        %463 = vmatpush2.bf16.msra.mxu0 0
        %464 = vmatprep.subr.bf16.mxu0 0
        %465 = vmatpush2.bf16.msra.mxu0 0
        %466 = vmatprep.subr.bf16.mxu0 0
        %467 = vmatpush2.bf16.msra.mxu0 0
        %468 = vmatprep.subr.bf16.mxu0 0
        %469 = vmatpush2.bf16.msra.mxu0 0
        %470 = vmatprep.subr.bf16.mxu0 0
        %471 = vmatpush2.bf16.msra.mxu0 0
        %472 = vmatprep.subr.bf16.mxu0 0
        %473 = vmatpush2.bf16.msra.mxu0 0
        %474 = vmatprep.subr.bf16.mxu0 0
        %475 = vmatpush2.bf16.msra.mxu0 0
        %476 = vmatprep.subr.bf16.mxu0 0
        %477 = vmatpush2.bf16.msra.mxu0 0
        %478 = vmatprep.mubr.bf16.mxu0 0
        %479 = vmatmul.mubr.bf16.gmra.mxu0 %v444
        %v480 = vpop.f32.mrf.mxu0
        %v481 = vadd.f32 0.0, %v480
        %v482 = vpop.f32.mrf.mxu0
        %v483 = vpop.f32.mrf.mxu0
        %v484 = vadd.f32 0.0, %v483
        %v485 = vpop.f32.mrf.mxu0
        %486 = vdwg.mxu0
        %v487 = vpack.c.bf16 %v484, %v481
        %v488 = vld [vmem:[#allocation2] sm:$0xff]
        %v489 = vld [vmem:[#allocation2 + $0x8] sm:$0xff]
        %491 = vrot.lane.b32.xlu0 %v487, 96
        %v492 = vpop.permute.xlu0 %491
        %vm493 = vcmask 64512
        %v495 = vsel %vm493, %v487, 0
        %v498 = vsel %vm493, %v492, 0
        %500 = vmatprep.subr.bf16.mxu0 0
        %501 = vmatpush1.bf16.xpose.msra.mxu0 0
        %502 = vmatprep.subr.bf16.mxu0 0
        %503 = vmatpush1.bf16.xpose.msra.mxu0 0
        %504 = vmatprep.subr.bf16.mxu0 0
        %505 = vmatpush1.bf16.xpose.msra.mxu0 0
        %506 = vmatprep.subr.bf16.mxu0 0
        %507 = vmatpush1.bf16.xpose.msra.mxu0 0
        %508 = vmatprep.subr.bf16.mxu0 0
        %509 = vmatpush1.bf16.xpose.msra.mxu0 0
        %510 = vmatprep.subr.bf16.mxu0 0
        %511 = vmatpush1.bf16.xpose.msra.mxu0 0
        %512 = vmatprep.subr.bf16.mxu0 0
        %513 = vmatpush1.bf16.xpose.msra.mxu0 0
        %514 = vmatprep.subr.bf16.mxu0 0
        %515 = vmatpush1.bf16.xpose.msra.mxu0 %v498
        %516 = vmatprep.subr.bf16.mxu0 0
        %517 = vmatpush2.bf16.xpose.msra.mxu0 0
        %518 = vmatprep.subr.bf16.mxu0 0
        %519 = vmatpush2.bf16.xpose.msra.mxu0 0
        %520 = vmatprep.subr.bf16.mxu0 0
        %521 = vmatpush2.bf16.xpose.msra.mxu0 0
        %522 = vmatprep.subr.bf16.mxu0 0
        %523 = vmatpush2.bf16.xpose.msra.mxu0 0
        %524 = vmatprep.subr.bf16.mxu0 0
        %525 = vmatpush2.bf16.xpose.msra.mxu0 0
        %526 = vmatprep.subr.bf16.mxu0 0
        %527 = vmatpush2.bf16.xpose.msra.mxu0 0
        %528 = vmatprep.subr.bf16.mxu0 0
        %529 = vmatpush2.bf16.xpose.msra.mxu0 0
        %530 = vmatprep.subr.bf16.mxu0 0
        %531 = vmatpush2.bf16.xpose.msra.mxu0 0
        %532 = vmatprep.mubr.bf16.mxu0 0
        %533 = vmatmul.mubr.bf16.gmra.mxu0 %v495
        %v534 = vpop.f32.mrf.mxu0
        %v535 = vadd.f32 %v488, %v534
        %v536 = vpop.f32.mrf.mxu0
        %v537 = vpop.f32.mrf.mxu0
        %v538 = vadd.f32 %v489, %v537
        %v539 = vpop.f32.mrf.mxu0
        %540 = vdwg.mxu0
        %vm541 = vcmask 130048
        %v542 = vsel %vm541, %v535, -inf
        %543 = vmax.xlane.f32.xlu0 %v542
        %v544 = vpop.xlane.xlu0 %543
        %v545 = vsel %vm541, %v538, -inf
        %546 = vmax.xlane.f32.xlu0 %v545
        %v547 = vpop.xlane.xlu0 %546
        %v548 = vsub.f32 %v535, %v544
        %v549 = vsub.f32 %v538, %v547
        %v550 = vmul.f32 %v548, 1.442695
        %v551 = vpow.pop %v550
        %v552 = vmul.f32 %v549, 1.442695
        %v553 = vpow.pop %v552
        %v554 = vsel %vm541, %v551, 0.0
        %555 = vadd.xlane.f32.xlu0 %v554
        %v556 = vpop.xlane.xlu0 %555
        %v557 = vsel %vm541, %v553, 0.0
        %558 = vadd.xlane.f32.xlu0 %v557
        %v559 = vpop.xlane.xlu0 %558
        %v560 = vrcp.pop %v556
        %v561 = vrcp.pop %v559
        %v562 = vmul.f32 %v551, %v560
        %v563 = vmul.f32 %v553, %v561
        %v564 = vpack.c.bf16 %v563, %v562
        %565 = vrot.lane.b32.xlu0 %v487, 64
        %v566 = vpop.permute.xlu0 %565
        %v569 = vsel %vm541, %v564, 0
        %571 = vmatprep.subr.bf16.mxu0 0
        %572 = vmatpush1.bf16.msra.mxu0 0
        %573 = vmatprep.subr.bf16.mxu0 0
        %574 = vmatpush1.bf16.msra.mxu0 0
        %575 = vmatprep.subr.bf16.mxu0 0
        %576 = vmatpush1.bf16.msra.mxu0 0
        %577 = vmatprep.subr.bf16.mxu0 0
        %578 = vmatpush1.bf16.msra.mxu0 0
        %579 = vmatprep.subr.bf16.mxu0 0
        %580 = vmatpush1.bf16.msra.mxu0 0
        %581 = vmatprep.subr.bf16.mxu0 0
        %582 = vmatpush1.bf16.msra.mxu0 0
        %583 = vmatprep.subr.bf16.mxu0 0
        %584 = vmatpush1.bf16.msra.mxu0 0
        %585 = vmatprep.subr.bf16.mxu0 0
        %586 = vmatpush1.bf16.msra.mxu0 %v566
        %587 = vmatprep.subr.bf16.mxu0 0
        %588 = vmatpush2.bf16.msra.mxu0 0
        %589 = vmatprep.subr.bf16.mxu0 0
        %590 = vmatpush2.bf16.msra.mxu0 0
        %591 = vmatprep.subr.bf16.mxu0 0
        %592 = vmatpush2.bf16.msra.mxu0 0
        %593 = vmatprep.subr.bf16.mxu0 0
        %594 = vmatpush2.bf16.msra.mxu0 0
        %595 = vmatprep.subr.bf16.mxu0 0
        %596 = vmatpush2.bf16.msra.mxu0 0
        %597 = vmatprep.subr.bf16.mxu0 0
        %598 = vmatpush2.bf16.msra.mxu0 0
        %599 = vmatprep.subr.bf16.mxu0 0
        %600 = vmatpush2.bf16.msra.mxu0 0
        %601 = vmatprep.subr.bf16.mxu0 0
        %602 = vmatpush2.bf16.msra.mxu0 0
        %603 = vmatprep.mubr.bf16.mxu0 0
        %604 = vmatmul.mubr.bf16.gmra.mxu0 %v569
        %v605 = vpop.f32.mrf.mxu0
        %v606 = vadd.f32 0.0, %v605
        %v607 = vpop.f32.mrf.mxu0
        %v608 = vpop.f32.mrf.mxu0
        %v609 = vadd.f32 0.0, %v608
        %v610 = vpop.f32.mrf.mxu0
        %611 = vdwg.mxu0
        %v612 = vpack.c.bf16 %v609, %v606
        %v614 = vunpack.c.l.b16 %v612
        %v615 = vunpack.c.h.b16 %v612
        %v616 = vpack.c.b16 %v614, %v614
        %v617 = vpack.c.b16 %v615, %v615
        %vm620 = vcmask 60416
        %621 = vst.msk [vmem:[#allocation3] sm:$0xf] %vm620, %v616
        %622 = vst.msk [vmem:[#allocation3 + $0x4] sm:$0xf] %vm620, %v617
        %623 = vrot.lane.b32.xlu0 %v487, 120
        %v624 = vpop.permute.xlu0 %623
        %625 = vrot.lane.b32.xlu0 %v487, 88
        %v626 = vpop.permute.xlu0 %625
        %v628 = vsel %vm493, %v624, 0
        %v631 = vsel %vm493, %v626, 0
        %633 = vmatprep.subr.bf16.mxu0 0
        %634 = vmatpush1.bf16.xpose.msra.mxu0 0
        %635 = vmatprep.subr.bf16.mxu0 0
        %636 = vmatpush1.bf16.xpose.msra.mxu0 0
        %637 = vmatprep.subr.bf16.mxu0 0
        %638 = vmatpush1.bf16.xpose.msra.mxu0 0
        %639 = vmatprep.subr.bf16.mxu0 0
        %640 = vmatpush1.bf16.xpose.msra.mxu0 0
        %641 = vmatprep.subr.bf16.mxu0 0
        %642 = vmatpush1.bf16.xpose.msra.mxu0 0
        %643 = vmatprep.subr.bf16.mxu0 0
        %644 = vmatpush1.bf16.xpose.msra.mxu0 0
        %645 = vmatprep.subr.bf16.mxu0 0
        %646 = vmatpush1.bf16.xpose.msra.mxu0 0
        %647 = vmatprep.subr.bf16.mxu0 0
        %648 = vmatpush1.bf16.xpose.msra.mxu0 %v631
        %649 = vmatprep.subr.bf16.mxu0 0
        %650 = vmatpush2.bf16.xpose.msra.mxu0 0
        %651 = vmatprep.subr.bf16.mxu0 0
        %652 = vmatpush2.bf16.xpose.msra.mxu0 0
        %653 = vmatprep.subr.bf16.mxu0 0
        %654 = vmatpush2.bf16.xpose.msra.mxu0 0
        %655 = vmatprep.subr.bf16.mxu0 0
        %656 = vmatpush2.bf16.xpose.msra.mxu0 0
        %657 = vmatprep.subr.bf16.mxu0 0
        %658 = vmatpush2.bf16.xpose.msra.mxu0 0
        %659 = vmatprep.subr.bf16.mxu0 0
        %660 = vmatpush2.bf16.xpose.msra.mxu0 0
        %661 = vmatprep.subr.bf16.mxu0 0
        %662 = vmatpush2.bf16.xpose.msra.mxu0 0
        %663 = vmatprep.subr.bf16.mxu0 0
        %664 = vmatpush2.bf16.xpose.msra.mxu0 0
        %665 = vmatprep.mubr.bf16.mxu0 0
        %666 = vmatmul.mubr.bf16.gmra.mxu0 %v628
        %v667 = vpop.f32.mrf.mxu0
        %v668 = vadd.f32 %v488, %v667
        %v669 = vpop.f32.mrf.mxu0
        %v670 = vpop.f32.mrf.mxu0
        %v671 = vadd.f32 %v489, %v670
        %v672 = vpop.f32.mrf.mxu0
        %673 = vdwg.mxu0
        %v674 = vsel %vm541, %v668, -inf
        %675 = vmax.xlane.f32.xlu0 %v674
        %v676 = vpop.xlane.xlu0 %675
        %v677 = vsel %vm541, %v671, -inf
        %678 = vmax.xlane.f32.xlu0 %v677
        %v679 = vpop.xlane.xlu0 %678
        %v680 = vsub.f32 %v668, %v676
        %v681 = vsub.f32 %v671, %v679
        %v682 = vmul.f32 %v680, 1.442695
        %v683 = vpow.pop %v682
        %v684 = vmul.f32 %v681, 1.442695
        %v685 = vpow.pop %v684
        %v686 = vsel %vm541, %v683, 0.0
        %687 = vadd.xlane.f32.xlu0 %v686
        %v688 = vpop.xlane.xlu0 %687
        %v689 = vsel %vm541, %v685, 0.0
        %690 = vadd.xlane.f32.xlu0 %v689
        %v691 = vpop.xlane.xlu0 %690
        %v692 = vrcp.pop %v688
        %v693 = vrcp.pop %v691
        %v694 = vmul.f32 %v683, %v692
        %v695 = vmul.f32 %v685, %v693
        %v696 = vpack.c.bf16 %v695, %v694
        %697 = vrot.lane.b32.xlu0 %v487, 56
        %v698 = vpop.permute.xlu0 %697
        %v701 = vsel %vm541, %v696, 0
        %703 = vmatprep.subr.bf16.mxu0 0
        %704 = vmatpush1.bf16.msra.mxu0 0
        %705 = vmatprep.subr.bf16.mxu0 0
        %706 = vmatpush1.bf16.msra.mxu0 0
        %707 = vmatprep.subr.bf16.mxu0 0
        %708 = vmatpush1.bf16.msra.mxu0 0
        %709 = vmatprep.subr.bf16.mxu0 0
        %710 = vmatpush1.bf16.msra.mxu0 0
        %711 = vmatprep.subr.bf16.mxu0 0
        %712 = vmatpush1.bf16.msra.mxu0 0
        %713 = vmatprep.subr.bf16.mxu0 0
        %714 = vmatpush1.bf16.msra.mxu0 0
        %715 = vmatprep.subr.bf16.mxu0 0
        %716 = vmatpush1.bf16.msra.mxu0 0
        %717 = vmatprep.subr.bf16.mxu0 0
        %718 = vmatpush1.bf16.msra.mxu0 %v698
        %719 = vmatprep.subr.bf16.mxu0 0
        %720 = vmatpush2.bf16.msra.mxu0 0
        %721 = vmatprep.subr.bf16.mxu0 0
        %722 = vmatpush2.bf16.msra.mxu0 0
        %723 = vmatprep.subr.bf16.mxu0 0
        %724 = vmatpush2.bf16.msra.mxu0 0
        %725 = vmatprep.subr.bf16.mxu0 0
        %726 = vmatpush2.bf16.msra.mxu0 0
        %727 = vmatprep.subr.bf16.mxu0 0
        %728 = vmatpush2.bf16.msra.mxu0 0
        %729 = vmatprep.subr.bf16.mxu0 0
        %730 = vmatpush2.bf16.msra.mxu0 0
        %731 = vmatprep.subr.bf16.mxu0 0
        %732 = vmatpush2.bf16.msra.mxu0 0
        %733 = vmatprep.subr.bf16.mxu0 0
        %734 = vmatpush2.bf16.msra.mxu0 0
        %735 = vmatprep.mubr.bf16.mxu0 0
        %736 = vmatmul.mubr.bf16.gmra.mxu0 %v701
        %v737 = vpop.f32.mrf.mxu0
        %v738 = vadd.f32 0.0, %v737
        %v739 = vpop.f32.mrf.mxu0
        %v740 = vpop.f32.mrf.mxu0
        %v741 = vadd.f32 0.0, %v740
        %v742 = vpop.f32.mrf.mxu0
        %743 = vdwg.mxu0
        %v744 = vpack.c.bf16 %v741, %v738
        %v746 = vunpack.c.l.b16 %v744
        %v747 = vunpack.c.h.b16 %v744
        %v748 = vpack.c.b16 %v746, %v746
        %v749 = vpack.c.b16 %v747, %v747
        %750 = vrot.lane.b32.xlu0 %v748, 8
        %v751 = vpop.permute.xlu0 %750
        %752 = vrot.lane.b32.xlu0 %v749, 8
        %v753 = vpop.permute.xlu0 %752
        %vm756 = vcmask 126016
        %757 = vst.msk [vmem:[#allocation3] sm:$0xf] %vm756, %v751
        %758 = vst.msk [vmem:[#allocation3 + $0x4] sm:$0xf] %vm756, %v753
        %759 = vrot.lane.b32.xlu0 %v487, 112
        %v760 = vpop.permute.xlu0 %759
        %761 = vrot.lane.b32.xlu0 %v487, 80
        %v762 = vpop.permute.xlu0 %761
        %v764 = vsel %vm493, %v760, 0
        %v767 = vsel %vm493, %v762, 0
        %769 = vmatprep.subr.bf16.mxu0 0
        %770 = vmatpush1.bf16.xpose.msra.mxu0 0
        %771 = vmatprep.subr.bf16.mxu0 0
        %772 = vmatpush1.bf16.xpose.msra.mxu0 0
        %773 = vmatprep.subr.bf16.mxu0 0
        %774 = vmatpush1.bf16.xpose.msra.mxu0 0
        %775 = vmatprep.subr.bf16.mxu0 0
        %776 = vmatpush1.bf16.xpose.msra.mxu0 0
        %777 = vmatprep.subr.bf16.mxu0 0
        %778 = vmatpush1.bf16.xpose.msra.mxu0 0
        %779 = vmatprep.subr.bf16.mxu0 0
        %780 = vmatpush1.bf16.xpose.msra.mxu0 0
        %781 = vmatprep.subr.bf16.mxu0 0
        %782 = vmatpush1.bf16.xpose.msra.mxu0 0
        %783 = vmatprep.subr.bf16.mxu0 0
        %784 = vmatpush1.bf16.xpose.msra.mxu0 %v767
        %785 = vmatprep.subr.bf16.mxu0 0
        %786 = vmatpush2.bf16.xpose.msra.mxu0 0
        %787 = vmatprep.subr.bf16.mxu0 0
        %788 = vmatpush2.bf16.xpose.msra.mxu0 0
        %789 = vmatprep.subr.bf16.mxu0 0
        %790 = vmatpush2.bf16.xpose.msra.mxu0 0
        %791 = vmatprep.subr.bf16.mxu0 0
        %792 = vmatpush2.bf16.xpose.msra.mxu0 0
        %793 = vmatprep.subr.bf16.mxu0 0
        %794 = vmatpush2.bf16.xpose.msra.mxu0 0
        %795 = vmatprep.subr.bf16.mxu0 0
        %796 = vmatpush2.bf16.xpose.msra.mxu0 0
        %797 = vmatprep.subr.bf16.mxu0 0
        %798 = vmatpush2.bf16.xpose.msra.mxu0 0
        %799 = vmatprep.subr.bf16.mxu0 0
        %800 = vmatpush2.bf16.xpose.msra.mxu0 0
        %801 = vmatprep.mubr.bf16.mxu0 0
        %802 = vmatmul.mubr.bf16.gmra.mxu0 %v764
        %v803 = vpop.f32.mrf.mxu0
        %v804 = vadd.f32 %v488, %v803
        %v805 = vpop.f32.mrf.mxu0
        %v806 = vpop.f32.mrf.mxu0
        %v807 = vadd.f32 %v489, %v806
        %v808 = vpop.f32.mrf.mxu0
        %809 = vdwg.mxu0
        %v810 = vsel %vm541, %v804, -inf
        %811 = vmax.xlane.f32.xlu0 %v810
        %v812 = vpop.xlane.xlu0 %811
        %v813 = vsel %vm541, %v807, -inf
        %814 = vmax.xlane.f32.xlu0 %v813
        %v815 = vpop.xlane.xlu0 %814
        %v816 = vsub.f32 %v804, %v812
        %v817 = vsub.f32 %v807, %v815
        %v818 = vmul.f32 %v816, 1.442695
        %v819 = vpow.pop %v818
        %v820 = vmul.f32 %v817, 1.442695
        %v821 = vpow.pop %v820
        %v822 = vsel %vm541, %v819, 0.0
        %823 = vadd.xlane.f32.xlu0 %v822
        %v824 = vpop.xlane.xlu0 %823
        %v825 = vsel %vm541, %v821, 0.0
        %826 = vadd.xlane.f32.xlu0 %v825
        %v827 = vpop.xlane.xlu0 %826
        %v828 = vrcp.pop %v824
        %v829 = vrcp.pop %v827
        %v830 = vmul.f32 %v819, %v828
        %v831 = vmul.f32 %v821, %v829
        %v832 = vpack.c.bf16 %v831, %v830
        %833 = vrot.lane.b32.xlu0 %v487, 48
        %v834 = vpop.permute.xlu0 %833
        %v837 = vsel %vm541, %v832, 0
        %839 = vmatprep.subr.bf16.mxu0 0
        %840 = vmatpush1.bf16.msra.mxu0 0
        %841 = vmatprep.subr.bf16.mxu0 0
        %842 = vmatpush1.bf16.msra.mxu0 0
        %843 = vmatprep.subr.bf16.mxu0 0
        %844 = vmatpush1.bf16.msra.mxu0 0
        %845 = vmatprep.subr.bf16.mxu0 0
        %846 = vmatpush1.bf16.msra.mxu0 0
        %847 = vmatprep.subr.bf16.mxu0 0
        %848 = vmatpush1.bf16.msra.mxu0 0
        %849 = vmatprep.subr.bf16.mxu0 0
        %850 = vmatpush1.bf16.msra.mxu0 0
        %851 = vmatprep.subr.bf16.mxu0 0
        %852 = vmatpush1.bf16.msra.mxu0 0
        %853 = vmatprep.subr.bf16.mxu0 0
        %854 = vmatpush1.bf16.msra.mxu0 %v834
        %855 = vmatprep.subr.bf16.mxu0 0
        %856 = vmatpush2.bf16.msra.mxu0 0
        %857 = vmatprep.subr.bf16.mxu0 0
        %858 = vmatpush2.bf16.msra.mxu0 0
        %859 = vmatprep.subr.bf16.mxu0 0
        %860 = vmatpush2.bf16.msra.mxu0 0
        %861 = vmatprep.subr.bf16.mxu0 0
        %862 = vmatpush2.bf16.msra.mxu0 0
        %863 = vmatprep.subr.bf16.mxu0 0
        %864 = vmatpush2.bf16.msra.mxu0 0
        %865 = vmatprep.subr.bf16.mxu0 0
        %866 = vmatpush2.bf16.msra.mxu0 0
        %867 = vmatprep.subr.bf16.mxu0 0
        %868 = vmatpush2.bf16.msra.mxu0 0
        %869 = vmatprep.subr.bf16.mxu0 0
        %870 = vmatpush2.bf16.msra.mxu0 0
        %871 = vmatprep.mubr.bf16.mxu0 0
        %872 = vmatmul.mubr.bf16.gmra.mxu0 %v837
        %v873 = vpop.f32.mrf.mxu0
        %v874 = vadd.f32 0.0, %v873
        %v875 = vpop.f32.mrf.mxu0
        %v876 = vpop.f32.mrf.mxu0
        %v877 = vadd.f32 0.0, %v876
        %v878 = vpop.f32.mrf.mxu0
        %879 = vdwg.mxu0
        %v880 = vpack.c.bf16 %v877, %v874
        %v882 = vunpack.c.l.b16 %v880
        %v883 = vunpack.c.h.b16 %v880
        %v884 = vpack.c.b16 %v882, %v882
        %v885 = vpack.c.b16 %v883, %v883
        %886 = vrot.lane.b32.xlu0 %v884, 16
        %v887 = vpop.permute.xlu0 %886
        %888 = vrot.lane.b32.xlu0 %v885, 16
        %v889 = vpop.permute.xlu0 %888
        %vm892 = vcmask 191616
        %893 = vst.msk [vmem:[#allocation3] sm:$0xf] %vm892, %v887
        %894 = vst.msk [vmem:[#allocation3 + $0x4] sm:$0xf] %vm892, %v889
        %895 = vrot.lane.b32.xlu0 %v487, 104
        %v896 = vpop.permute.xlu0 %895
        %897 = vrot.lane.b32.xlu0 %v487, 72
        %v898 = vpop.permute.xlu0 %897
        %v900 = vsel %vm493, %v896, 0
        %v903 = vsel %vm493, %v898, 0
        %905 = vmatprep.subr.bf16.mxu0 0
        %906 = vmatpush1.bf16.xpose.msra.mxu0 0
        %907 = vmatprep.subr.bf16.mxu0 0
        %908 = vmatpush1.bf16.xpose.msra.mxu0 0
        %909 = vmatprep.subr.bf16.mxu0 0
        %910 = vmatpush1.bf16.xpose.msra.mxu0 0
        %911 = vmatprep.subr.bf16.mxu0 0
        %912 = vmatpush1.bf16.xpose.msra.mxu0 0
        %913 = vmatprep.subr.bf16.mxu0 0
        %914 = vmatpush1.bf16.xpose.msra.mxu0 0
        %915 = vmatprep.subr.bf16.mxu0 0
        %916 = vmatpush1.bf16.xpose.msra.mxu0 0
        %917 = vmatprep.subr.bf16.mxu0 0
        %918 = vmatpush1.bf16.xpose.msra.mxu0 0
        %919 = vmatprep.subr.bf16.mxu0 0
        %920 = vmatpush1.bf16.xpose.msra.mxu0 %v903
        %921 = vmatprep.subr.bf16.mxu0 0
        %922 = vmatpush2.bf16.xpose.msra.mxu0 0
        %923 = vmatprep.subr.bf16.mxu0 0
        %924 = vmatpush2.bf16.xpose.msra.mxu0 0
        %925 = vmatprep.subr.bf16.mxu0 0
        %926 = vmatpush2.bf16.xpose.msra.mxu0 0
        %927 = vmatprep.subr.bf16.mxu0 0
        %928 = vmatpush2.bf16.xpose.msra.mxu0 0
        %929 = vmatprep.subr.bf16.mxu0 0
        %930 = vmatpush2.bf16.xpose.msra.mxu0 0
        %931 = vmatprep.subr.bf16.mxu0 0
        %932 = vmatpush2.bf16.xpose.msra.mxu0 0
        %933 = vmatprep.subr.bf16.mxu0 0
        %934 = vmatpush2.bf16.xpose.msra.mxu0 0
        %935 = vmatprep.subr.bf16.mxu0 0
        %936 = vmatpush2.bf16.xpose.msra.mxu0 0
        %937 = vmatprep.mubr.bf16.mxu0 0
        %938 = vmatmul.mubr.bf16.gmra.mxu0 %v900
        %v939 = vpop.f32.mrf.mxu0
        %v940 = vadd.f32 %v488, %v939
        %v941 = vpop.f32.mrf.mxu0
        %v942 = vpop.f32.mrf.mxu0
        %v943 = vadd.f32 %v489, %v942
        %v944 = vpop.f32.mrf.mxu0
        %945 = vdwg.mxu0
        %v946 = vsel %vm541, %v940, -inf
        %947 = vmax.xlane.f32.xlu0 %v946
        %v948 = vpop.xlane.xlu0 %947
        %v949 = vsel %vm541, %v943, -inf
        %950 = vmax.xlane.f32.xlu0 %v949
        %v951 = vpop.xlane.xlu0 %950
        %v952 = vsub.f32 %v940, %v948
        %v953 = vsub.f32 %v943, %v951
        %v954 = vmul.f32 %v952, 1.442695
        %v955 = vpow.pop %v954
        %v956 = vmul.f32 %v953, 1.442695
        %v957 = vpow.pop %v956
        %v958 = vsel %vm541, %v955, 0.0
        %959 = vadd.xlane.f32.xlu0 %v958
        %v960 = vpop.xlane.xlu0 %959
        %v961 = vsel %vm541, %v957, 0.0
        %962 = vadd.xlane.f32.xlu0 %v961
        %v963 = vpop.xlane.xlu0 %962
        %v964 = vrcp.pop %v960
        %v965 = vrcp.pop %v963
        %v966 = vmul.f32 %v955, %v964
        %v967 = vmul.f32 %v957, %v965
        %v968 = vpack.c.bf16 %v967, %v966
        %969 = vrot.lane.b32.xlu0 %v487, 40
        %v970 = vpop.permute.xlu0 %969
        %v973 = vsel %vm541, %v968, 0
        %975 = vmatprep.subr.bf16.mxu0 0
        %976 = vmatpush1.bf16.msra.mxu0 0
        %977 = vmatprep.subr.bf16.mxu0 0
        %978 = vmatpush1.bf16.msra.mxu0 0
        %979 = vmatprep.subr.bf16.mxu0 0
        %980 = vmatpush1.bf16.msra.mxu0 0
        %981 = vmatprep.subr.bf16.mxu0 0
        %982 = vmatpush1.bf16.msra.mxu0 0
        %983 = vmatprep.subr.bf16.mxu0 0
        %984 = vmatpush1.bf16.msra.mxu0 0
        %985 = vmatprep.subr.bf16.mxu0 0
        %986 = vmatpush1.bf16.msra.mxu0 0
        %987 = vmatprep.subr.bf16.mxu0 0
        %988 = vmatpush1.bf16.msra.mxu0 0
        %989 = vmatprep.subr.bf16.mxu0 0
        %990 = vmatpush1.bf16.msra.mxu0 %v970
        %991 = vmatprep.subr.bf16.mxu0 0
        %992 = vmatpush2.bf16.msra.mxu0 0
        %993 = vmatprep.subr.bf16.mxu0 0
        %994 = vmatpush2.bf16.msra.mxu0 0
        %995 = vmatprep.subr.bf16.mxu0 0
        %996 = vmatpush2.bf16.msra.mxu0 0
        %997 = vmatprep.subr.bf16.mxu0 0
        %998 = vmatpush2.bf16.msra.mxu0 0
        %999 = vmatprep.subr.bf16.mxu0 0
        %1000 = vmatpush2.bf16.msra.mxu0 0
        %1001 = vmatprep.subr.bf16.mxu0 0
        %1002 = vmatpush2.bf16.msra.mxu0 0
        %1003 = vmatprep.subr.bf16.mxu0 0
        %1004 = vmatpush2.bf16.msra.mxu0 0
        %1005 = vmatprep.subr.bf16.mxu0 0
        %1006 = vmatpush2.bf16.msra.mxu0 0
        %1007 = vmatprep.mubr.bf16.mxu0 0
        %1008 = vmatmul.mubr.bf16.gmra.mxu0 %v973
        %v1009 = vpop.f32.mrf.mxu0
        %v1010 = vadd.f32 0.0, %v1009
        %v1011 = vpop.f32.mrf.mxu0
        %v1012 = vpop.f32.mrf.mxu0
        %v1013 = vadd.f32 0.0, %v1012
        %v1014 = vpop.f32.mrf.mxu0
        %1015 = vdwg.mxu0
        %v1016 = vpack.c.bf16 %v1013, %v1010
        %v1018 = vunpack.c.l.b16 %v1016
        %v1019 = vunpack.c.h.b16 %v1016
        %v1020 = vpack.c.b16 %v1018, %v1018
        %v1021 = vpack.c.b16 %v1019, %v1019
        %1022 = vrot.lane.b32.xlu0 %v1020, 24
        %v1023 = vpop.permute.xlu0 %1022
        %1024 = vrot.lane.b32.xlu0 %v1021, 24
        %v1025 = vpop.permute.xlu0 %1024
        %vm1028 = vcmask 257216
        %1029 = vst.msk [vmem:[#allocation3] sm:$0xf] %vm1028, %v1023
        %1030 = vst.msk [vmem:[#allocation3 + $0x4] sm:$0xf] %vm1028, %v1025
        %v1031 = vld [vmem:[#allocation3] sm:$0xf]
        %v1032 = vld [vmem:[#allocation3 + $0x4] sm:$0xf]
        %v1033 = vld [vmem:[%s328] sm:$0xf]
        %v1034 = vld [vmem:[%s328 + $0x4] sm:$0xf]
        %v1035 = vld [vmem:[%s328 + $0x8] sm:$0xf]
        %v1036 = vld [vmem:[%s328 + $0xc] sm:$0xf]
        %v1037 = vlaneseq
        %v1038 = vshrl.u32 %v1037, 7
        %v1039 = vsub.s32 0, %v1038
        %v1040 = vrot.slane %v424, %v1039
        %v1043 = vunpack.c.l.b16 %v1031
        %v1044 = vunpack.c.l.b16 %v1032
        %v1045 = vpack.c.b16 %v1044, %v1043
        %v1050 = vunpack.c.l.b16 %v1033
        %v1051 = vunpack.c.l.b16 %v1034
        %v1052 = vunpack.c.l.b16 %v1035
        %v1053 = vunpack.c.l.b16 %v1036
        %v1054 = vpack.c.b16 %v1051, %v1050
        %v1055 = vpack.c.b16 %v1053, %v1052
        %v1059 = vsel %vm442, %v1045, 0
        %1061 = vmatprep.subr.bf16.mxu0 0
        %1062 = vmatpush1.bf16.msra.mxu0 0
        %1063 = vmatprep.subr.bf16.mxu0 0
        %1064 = vmatpush1.bf16.msra.mxu0 0
        %1065 = vmatprep.subr.bf16.mxu0 0
        %1066 = vmatpush1.bf16.msra.mxu0 0
        %1067 = vmatprep.subr.bf16.mxu0 0
        %1068 = vmatpush1.bf16.msra.mxu0 0
        %1069 = vmatprep.subr.bf16.mxu0 0
        %1070 = vmatpush1.bf16.msra.mxu0 0
        %1071 = vmatprep.subr.bf16.mxu0 0
        %1072 = vmatpush1.bf16.msra.mxu0 0
        %1073 = vmatprep.subr.bf16.mxu0 0
        %1074 = vmatpush1.bf16.msra.mxu0 %v1055
        %1075 = vmatprep.subr.bf16.mxu0 0
        %1076 = vmatpush1.bf16.msra.mxu0 %v1054
        %1077 = vmatprep.subr.bf16.mxu0 0
        %1078 = vmatpush2.bf16.msra.mxu0 0
        %1079 = vmatprep.subr.bf16.mxu0 0
        %1080 = vmatpush2.bf16.msra.mxu0 0
        %1081 = vmatprep.subr.bf16.mxu0 0
        %1082 = vmatpush2.bf16.msra.mxu0 0
        %1083 = vmatprep.subr.bf16.mxu0 0
        %1084 = vmatpush2.bf16.msra.mxu0 0
        %1085 = vmatprep.subr.bf16.mxu0 0
        %1086 = vmatpush2.bf16.msra.mxu0 0
        %1087 = vmatprep.subr.bf16.mxu0 0
        %1088 = vmatpush2.bf16.msra.mxu0 0
        %1089 = vmatprep.subr.bf16.mxu0 0
        %1090 = vmatpush2.bf16.msra.mxu0 0
        %1091 = vmatprep.subr.bf16.mxu0 0
        %1092 = vmatpush2.bf16.msra.mxu0 0
        %1093 = vmatprep.mubr.bf16.mxu0 0
        %1094 = vmatmul.mubr.bf16.gmra.mxu0 %v1059
        %v1095 = vpop.f32.mrf.mxu0
        %v1096 = vadd.f32 %v1040, %v1095
        %v1097 = vpop.f32.mrf.mxu0
        %v1098 = vpop.f32.mrf.mxu0
        %v1099 = vadd.f32 %v1040, %v1098
        %v1100 = vpop.f32.mrf.mxu0
        %1101 = vdwg.mxu0
        %v1102 = vadd.f32 %v1096, %v422
        %v1103 = vadd.f32 %v1099, %v423
        %v1104 = vsel %vm442, %v1102, 0.0
        %1105 = vadd.xlane.f32.xlu0 %v1104
        %v1106 = vpop.xlane.xlu0 %1105
        %v1107 = vsel %vm442, %v1103, 0.0
        %1108 = vadd.xlane.f32.xlu0 %v1107
        %v1109 = vpop.xlane.xlu0 %1108
        %v1110 = vrcp.pop 32.0
        %v1111 = vmul.f32 %v1106, %v1110
        %v1112 = vmul.f32 %v1109, %v1110
        %v1113 = vsub.f32 %v1102, %v1111
        %v1114 = vsub.f32 %v1103, %v1112
        %v1115 = vmul.f32 %v1113, %v1113
        %v1116 = vmul.f32 %v1114, %v1114
        %v1117 = vsel %vm442, %v1115, 0.0
        %1118 = vadd.xlane.f32.xlu0 %v1117
        %v1119 = vpop.xlane.xlu0 %1118
        %v1120 = vsel %vm442, %v1116, 0.0
        %1121 = vadd.xlane.f32.xlu0 %v1120
        %v1122 = vpop.xlane.xlu0 %1121
        %v1123 = vmul.f32 %v1119, %v1110
        %v1124 = vmul.f32 %v1122, %v1110
        %v1125 = vadd.f32 %v1123, 1e-05
        %v1126 = vadd.f32 %v1124, 1e-05
        %v1127 = vrsqrt.pop %v1125
        %v1128 = vrsqrt.pop %v1126
        %v1129 = vmul.f32 %v1113, %v1127
        %v1130 = vmul.f32 %v1114, %v1128
        %v1131 = vlaneseq
        %v1132 = vshrl.u32 %v1131, 7
        %v1133 = vsub.s32 1, %v1132
        %v1134 = vrot.slane %v424, %v1133
        %v1135 = vmul.f32 %v1129, %v1134
        %v1136 = vmul.f32 %v1130, %v1134
        %v1137 = vlaneseq
        %v1138 = vshrl.u32 %v1137, 7
        %v1139 = vsub.s32 2, %v1138
        %v1140 = vrot.slane %v424, %v1139
        %v1141 = vadd.f32 %v1135, %v1140
        %v1142 = vadd.f32 %v1136, %v1140
        %v1143 = vpack.c.bf16 %v1142, %v1141
        %v1144 = vld [vmem:[%s333] sm:$0xf]
        %v1145 = vld [vmem:[%s333 + $0x4] sm:$0xf]
        %v1146 = vld [vmem:[%s333 + $0x8] sm:$0xf]
        %v1147 = vld [vmem:[%s333 + $0xc] sm:$0xf]
        %v1148 = vlaneseq
        %v1149 = vshrl.u32 %v1148, 7
        %v1150 = vsub.s32 6, %v1149
        %v1151 = vrot.slane %v424, %v1150
        %v1156 = vunpack.c.l.b16 %v1144
        %v1157 = vunpack.c.l.b16 %v1145
        %v1158 = vunpack.c.l.b16 %v1146
        %v1159 = vunpack.c.l.b16 %v1147
        %v1160 = vpack.c.b16 %v1157, %v1156
        %v1161 = vpack.c.b16 %v1159, %v1158
        %v1165 = vsel %vm442, %v1143, 0
        %1167 = vmatprep.subr.bf16.mxu0 0
        %1168 = vmatpush1.bf16.msra.mxu0 0
        %1169 = vmatprep.subr.bf16.mxu0 0
        %1170 = vmatpush1.bf16.msra.mxu0 0
        %1171 = vmatprep.subr.bf16.mxu0 0
        %1172 = vmatpush1.bf16.msra.mxu0 0
        %1173 = vmatprep.subr.bf16.mxu0 0
        %1174 = vmatpush1.bf16.msra.mxu0 0
        %1175 = vmatprep.subr.bf16.mxu0 0
        %1176 = vmatpush1.bf16.msra.mxu0 0
        %1177 = vmatprep.subr.bf16.mxu0 0
        %1178 = vmatpush1.bf16.msra.mxu0 0
        %1179 = vmatprep.subr.bf16.mxu0 0
        %1180 = vmatpush1.bf16.msra.mxu0 %v1161
        %1181 = vmatprep.subr.bf16.mxu0 0
        %1182 = vmatpush1.bf16.msra.mxu0 %v1160
        %1183 = vmatprep.subr.bf16.mxu0 0
        %1184 = vmatpush2.bf16.msra.mxu0 0
        %1185 = vmatprep.subr.bf16.mxu0 0
        %1186 = vmatpush2.bf16.msra.mxu0 0
        %1187 = vmatprep.subr.bf16.mxu0 0
        %1188 = vmatpush2.bf16.msra.mxu0 0
        %1189 = vmatprep.subr.bf16.mxu0 0
        %1190 = vmatpush2.bf16.msra.mxu0 0
        %1191 = vmatprep.subr.bf16.mxu0 0
        %1192 = vmatpush2.bf16.msra.mxu0 0
        %1193 = vmatprep.subr.bf16.mxu0 0
        %1194 = vmatpush2.bf16.msra.mxu0 0
        %1195 = vmatprep.subr.bf16.mxu0 0
        %1196 = vmatpush2.bf16.msra.mxu0 0
        %1197 = vmatprep.subr.bf16.mxu0 0
        %1198 = vmatpush2.bf16.msra.mxu0 0
        %1199 = vmatprep.mubr.bf16.mxu0 0
        %1200 = vmatmul.mubr.bf16.gmra.mxu0 %v1165
        %v1201 = vpop.f32.mrf.mxu0
        %v1202 = vadd.f32 %v1151, %v1201
        %v1203 = vpop.f32.mrf.mxu0
        %v1204 = vpop.f32.mrf.mxu0
        %v1205 = vadd.f32 %v1151, %v1204
        %v1206 = vpop.f32.mrf.mxu0
        %1207 = vdwg.mxu0
        %v1208 = vmax.f32 %v1202, 0.0
        %v1209 = vmax.f32 %v1205, 0.0
        %v1210 = vpack.c.bf16 %v1209, %v1208
        %v1211 = vld [vmem:[%s338] sm:$0xf]
        %v1212 = vld [vmem:[%s338 + $0x4] sm:$0xf]
        %v1213 = vld [vmem:[%s338 + $0x8] sm:$0xf]
        %v1214 = vld [vmem:[%s338 + $0xc] sm:$0xf]
        %v1215 = vld [vmem:[%s338 + $0x10] sm:$0xf]
        %v1216 = vld [vmem:[%s338 + $0x14] sm:$0xf]
        %v1217 = vld [vmem:[%s338 + $0x18] sm:$0xf]
        %v1218 = vld [vmem:[%s338 + $0x1c] sm:$0xf]
        %v1219 = vld [vmem:[%s338 + $0x20] sm:$0xf]
        %v1220 = vld [vmem:[%s338 + $0x24] sm:$0xf]
        %v1221 = vld [vmem:[%s338 + $0x28] sm:$0xf]
        %v1222 = vld [vmem:[%s338 + $0x2c] sm:$0xf]
        %v1223 = vld [vmem:[%s338 + $0x30] sm:$0xf]
        %v1224 = vld [vmem:[%s338 + $0x34] sm:$0xf]
        %v1225 = vld [vmem:[%s338 + $0x38] sm:$0xf]
        %v1226 = vld [vmem:[%s338 + $0x3c] sm:$0xf]
        %v1227 = vlaneseq
        %v1228 = vshrl.u32 %v1227, 7
        %v1229 = vsub.s32 3, %v1228
        %v1230 = vrot.slane %v424, %v1229
        %v1247 = vunpack.c.l.b16 %v1211
        %v1248 = vunpack.c.l.b16 %v1212
        %v1249 = vunpack.c.l.b16 %v1213
        %v1250 = vunpack.c.l.b16 %v1214
        %v1251 = vunpack.c.l.b16 %v1215
        %v1252 = vunpack.c.l.b16 %v1216
        %v1253 = vunpack.c.l.b16 %v1217
        %v1254 = vunpack.c.l.b16 %v1218
        %v1255 = vunpack.c.l.b16 %v1219
        %v1256 = vunpack.c.l.b16 %v1220
        %v1257 = vunpack.c.l.b16 %v1221
        %v1258 = vunpack.c.l.b16 %v1222
        %v1259 = vunpack.c.l.b16 %v1223
        %v1260 = vunpack.c.l.b16 %v1224
        %v1261 = vunpack.c.l.b16 %v1225
        %v1262 = vunpack.c.l.b16 %v1226
        %v1263 = vpack.c.b16 %v1248, %v1247
        %v1264 = vpack.c.b16 %v1250, %v1249
        %v1265 = vpack.c.b16 %v1252, %v1251
        %v1266 = vpack.c.b16 %v1254, %v1253
        %v1267 = vpack.c.b16 %v1256, %v1255
        %v1268 = vpack.c.b16 %v1258, %v1257
        %v1269 = vpack.c.b16 %v1260, %v1259
        %v1270 = vpack.c.b16 %v1262, %v1261
        %1279 = vmatprep.subr.bf16.mxu0 0
        %1280 = vmatpush1.bf16.msra.mxu0 %v1270
        %1281 = vmatprep.subr.bf16.mxu0 0
        %1282 = vmatpush1.bf16.msra.mxu0 %v1269
        %1283 = vmatprep.subr.bf16.mxu0 0
        %1284 = vmatpush1.bf16.msra.mxu0 %v1268
        %1285 = vmatprep.subr.bf16.mxu0 0
        %1286 = vmatpush1.bf16.msra.mxu0 %v1267
        %1287 = vmatprep.subr.bf16.mxu0 0
        %1288 = vmatpush1.bf16.msra.mxu0 %v1266
        %1289 = vmatprep.subr.bf16.mxu0 0
        %1290 = vmatpush1.bf16.msra.mxu0 %v1265
        %1291 = vmatprep.subr.bf16.mxu0 0
        %1292 = vmatpush1.bf16.msra.mxu0 %v1264
        %1293 = vmatprep.subr.bf16.mxu0 0
        %1294 = vmatpush1.bf16.msra.mxu0 %v1263
        %1295 = vmatprep.subr.bf16.mxu0 0
        %1296 = vmatpush2.bf16.msra.mxu0 0
        %1297 = vmatprep.subr.bf16.mxu0 0
        %1298 = vmatpush2.bf16.msra.mxu0 0
        %1299 = vmatprep.subr.bf16.mxu0 0
        %1300 = vmatpush2.bf16.msra.mxu0 0
        %1301 = vmatprep.subr.bf16.mxu0 0
        %1302 = vmatpush2.bf16.msra.mxu0 0
        %1303 = vmatprep.subr.bf16.mxu0 0
        %1304 = vmatpush2.bf16.msra.mxu0 0
        %1305 = vmatprep.subr.bf16.mxu0 0
        %1306 = vmatpush2.bf16.msra.mxu0 0
        %1307 = vmatprep.subr.bf16.mxu0 0
        %1308 = vmatpush2.bf16.msra.mxu0 0
        %1309 = vmatprep.subr.bf16.mxu0 0
        %1310 = vmatpush2.bf16.msra.mxu0 0
        %1311 = vmatprep.mubr.bf16.mxu0 0
        %1312 = vmatmul.mubr.bf16.gmra.mxu0 %v1210
        %v1313 = vpop.f32.mrf.mxu0
        %v1314 = vadd.f32 %v1230, %v1313
        %v1315 = vpop.f32.mrf.mxu0
        %v1316 = vpop.f32.mrf.mxu0
        %v1317 = vadd.f32 %v1230, %v1316
        %v1318 = vpop.f32.mrf.mxu0
        %1319 = vdwg.mxu0
        %v1320 = vadd.f32 %v1314, %v1141
        %v1321 = vadd.f32 %v1317, %v1142
        %v1322 = vsel %vm442, %v1320, 0.0
        %1323 = vadd.xlane.f32.xlu0 %v1322
        %v1324 = vpop.xlane.xlu0 %1323
        %v1325 = vsel %vm442, %v1321, 0.0
        %1326 = vadd.xlane.f32.xlu0 %v1325
        %v1327 = vpop.xlane.xlu0 %1326
        %v1328 = vmul.f32 %v1324, %v1110
        %v1329 = vmul.f32 %v1327, %v1110
        %v1330 = vsub.f32 %v1320, %v1328
        %v1331 = vsub.f32 %v1321, %v1329
        %v1332 = vmul.f32 %v1330, %v1330
        %v1333 = vmul.f32 %v1331, %v1331
        %v1334 = vsel %vm442, %v1332, 0.0
        %1335 = vadd.xlane.f32.xlu0 %v1334
        %v1336 = vpop.xlane.xlu0 %1335
        %v1337 = vsel %vm442, %v1333, 0.0
        %1338 = vadd.xlane.f32.xlu0 %v1337
        %v1339 = vpop.xlane.xlu0 %1338
        %v1340 = vmul.f32 %v1336, %v1110
        %v1341 = vmul.f32 %v1339, %v1110
        %v1342 = vadd.f32 %v1340, 1e-05
        %v1343 = vadd.f32 %v1341, 1e-05
        %v1344 = vrsqrt.pop %v1342
        %v1345 = vrsqrt.pop %v1343
        %v1346 = vmul.f32 %v1330, %v1344
        %v1347 = vmul.f32 %v1331, %v1345
        %v1348 = vlaneseq
        %v1349 = vshrl.u32 %v1348, 7
        %v1350 = vsub.s32 4, %v1349
        %v1351 = vrot.slane %v424, %v1350
        %v1352 = vmul.f32 %v1346, %v1351
        %v1353 = vmul.f32 %v1347, %v1351
        %v1354 = vlaneseq
        %v1355 = vshrl.u32 %v1354, 7
        %v1356 = vsub.s32 5, %v1355
        %v1357 = vrot.slane %v424, %v1356
        %v1358 = vadd.f32 %v1352, %v1357
        %v1359 = vadd.f32 %v1353, %v1357
        %1360 = vst.msk [vmem:[#allocation5] sm:$0xff] %vm442, %v1358
        %1361 = vst.msk [vmem:[#allocation5 + $0x8] sm:$0xff] %vm442, %v1359
        // Predicated region
        $region87: #{tpu_custom_call.1} parent=47 // pred_check
          %p1362 = pneg %p205
        $region88: #{tpu_custom_call.1} parent=47 // pred_check_branch
          %1364 = sbr.rel (%p1362) target = $region90
        $region89: #{tpu_custom_call.1} parent=47 // pred_region
          %s1366 = ssub.s32 256, 256
          %1367 = vsyncadd [#allocation6], %s1366
          %s1368 = sshll.u32 [#allocation5], 4
          %s1369 = int_to_ptr.vmem [resolvable:$true] %s1368
          %1374 = dma.vmem_to_hbm [thread:$0]  %s1369, 256, %s8, [#allocation6], 128, 128, 8
        $region90: #{tpu_custom_call.1} parent=47 // pred_fallthru
          _
        // Predicated region
        $region91: #{tpu_custom_call.1} parent=47 // pred_check
          %p1375 = pneg %p205
        $region92: #{tpu_custom_call.1} parent=47 // pred_check_branch
          %1377 = sbr.rel (%p1375) target = $region94
        $region93: #{tpu_custom_call.1} parent=47 // pred_region
          %1378 = dma.done [#allocation6], 256
        $region94: #{tpu_custom_call.1} parent=47 // pred_fallthru
          _
      $region48: #{tpu_custom_call.1} parent=5 // pred_fallthru
        _
      %p1379 = scmp.le.s32.totalorder 2, %s15
      // Predicated region
      $region95: #{tpu_custom_call.1} parent=5 // pred_check
        %p1380 = pneg %p1379
      $region96: #{tpu_custom_call.1} parent=5 // pred_check_branch
        %1382 = sbr.rel (%p1380) target = $region98
      $region97: #{tpu_custom_call.1} parent=5 // pred_region
        %s1383 = ssub.s32 %s15, 2
      $region98: #{tpu_custom_call.1} parent=5 // pred_fallthru
        _
    $region6: #{tpu_custom_call.1} parent=1 // loop_footer
      %s19 = sadd.s32 1, %s15
    $region7: #{tpu_custom_call.1} parent=1 // loop_footer_branch
      %14 = sbr.rel target = $region3
    $region8: #{tpu_custom_call.1} parent=1 // loop_exit
      _
    %1384 = vsyncpa [#allocation6], 1
    %s1385 = scalar_lea.sflag [#allocation6], 1
    %1386 = vsyncpa %s1385, 1
  %1387 = vsyncmov [#allocation4]
  %s1388 = vpop.sfrf %1387
  %p1389 = scmp.eq.s32.totalorder %s1388, 0
  %p1390 = pneg %p1389
  %1392 = shalt.err (%p1390)

</llo_original>
